<compile_context>
chip_gen: v5e
topology: v5e:2x2
jax: 0.10.0
libtpu: 0.0.40
codegen_flags: <defaults>
</compile_context>

<pallas_src>
import math
import numpy as np
import jax
import jax.numpy as jnp
from jax.experimental import pallas as pl
from jax.experimental.pallas import tpu as pltpu

# ---- sizes implied by the module (small synthetic config) -------------------
B = 2                         # batch
D = 32                        # dimOut = x.size(1)
NB_FCN = 1                    # len(fcn_grad)
FAC_HIDDEN = 4                # BaseNet.fac_hidden
IN_AFFINE = D * NB_FCN        # fuse_layer input dim
H = IN_AFFINE * FAC_HIDDEN    # hidden_sz = 128
NUM_LAYERS = 3                # number of LSTMNetBlocks

B_PAD = 8                     # sublane-pad the batch to a full (8,*) tile
D_PAD = 128                   # lane-pad the feature dim to a full 128-lane tile


# ---- Pallas kernel: all NUM_LAYERS meta-iterations, single gridless call -----
def _metanet_fused_kernel(x0_ref, h0_ref, c0_ref,
                          wf_ref, bf_ref,
                          wih_ref, whh_ref, bg_ref,
                          ws_ref, bs_ref,
                          xk_ref):
    x_k = x0_ref[...]                     # (B_PAD, D_PAD) f32, lane-padded
    h = h0_ref[...]                       # (B_PAD, H)     f32
    c = c0_ref[...]                       # (B_PAD, H)     f32

    wf = wf_ref[...]                      # (D_PAD, H) bf16, zero-row padded W_fuse^T
    bf = bf_ref[...]                      # (1, H)     f32
    ws = ws_ref[...]                      # (H, D_PAD) bf16, zero-col padded W_scale^T
    bs = bs_ref[...]                      # (1, D_PAD) f32

    # Unrolled layer loop (static trip count, strictly sequential dependency).
    for l in range(NUM_LAYERS):
        # FuseLayerAffine: xf = gx @ W_fuse^T + b_fuse (gx == x_k for the
        # synthetic quadratic objective).
        xf = jnp.dot(x_k.astype(jnp.bfloat16), wf,
                     preferred_element_type=jnp.float32) + bf          # (B_PAD, H)

        # LSTMCell with two accumulating gate matmuls (no lane-axis concat).
        # Gate columns were reordered at pack time to [i, f, o, g].
        gates = (jnp.dot(xf.astype(jnp.bfloat16), wih_ref[l],
                         preferred_element_type=jnp.float32)
                 + jnp.dot(h.astype(jnp.bfloat16), whh_ref[l],
                           preferred_element_type=jnp.float32)
                 + bg_ref[l])                                           # (B_PAD, 4H)

        sig = jax.nn.sigmoid(gates[:, 0:3 * H])     # one EUP launch for i,f,o
        g_g = jnp.tanh(gates[:, 3 * H:4 * H])       # one tanh for g
        i_g = sig[:, 0:H]
        f_g = sig[:, H:2 * H]
        o_g = sig[:, 2 * H:3 * H]

        c = f_g * c + i_g * g_g
        h = o_g * jnp.tanh(c)

        # LSTMNetBlock returns (c_0, (h_0, c_0)) -> block output fed to scale is c.
        # ScaleLayerAffine: delta = c @ W_scale^T + b_scale (lane-padded).
        delta = jnp.dot(c.astype(jnp.bfloat16), ws,
                        preferred_element_type=jnp.float32) + bs        # (B_PAD, D_PAD)
        x_k = x_k + delta                            # padded lanes stay 0

        xk_ref[l] = x_k                              # static first-axis store


@jax.jit
def _run_fused(x, h0p, c0p, wf_t, bf, wih, whh, bg, ws_t, bs):
    # Pad x to a full (8, 128) tile inside the jitted launch path.
    x0p = jnp.zeros((B_PAD, D_PAD), jnp.float32).at[:B, :D].set(x)
    vmem = pl.BlockSpec(memory_space=pltpu.MemorySpace.VMEM)
    return pl.pallas_call(
        _metanet_fused_kernel,
        out_shape=jax.ShapeDtypeStruct((NUM_LAYERS, B_PAD, D_PAD), jnp.float32),
        in_specs=[vmem] * 10,       # everything VMEM-resident, single DMA each
        out_specs=vmem,
        compiler_params=pltpu.CompilerParams(vmem_limit_bytes=16 << 20),
    )(x0p, h0p, c0p, wf_t, bf, wih, whh, bg, ws_t, bs)


# ---- plain-JAX glue ----------------------------------------------------------
def eval_fcn(x_k):
    """Synthetic objective replacing fcn_grad: f(x)=0.5||x||^2, g(x)=x."""
    fxc = 0.5 * jnp.sum(x_k * x_k, axis=-1)    # (B,)
    gxc = x_k                                  # (B, D)
    fx = jnp.stack([fxc], axis=1)              # (B, NB_FCN)   torch.stack(dim=1)
    gx = jnp.stack([gxc], axis=1)              # (B, NB_FCN, D)
    return fx, gx


def init_params(key):
    """torch-layout parameters, matching the module's init_weights exactly."""
    k_fuse, *k_lstm = jax.random.split(key, 1 + NUM_LAYERS)

    # FuseLayerAffine: kron(ones(H//in,1), eye(in)) + N(0, 0.01), bias 0
    wf = (np.kron(np.ones((H // IN_AFFINE, 1)), np.eye(IN_AFFINE))
          + 0.01 * np.asarray(jax.random.normal(k_fuse, (H, IN_AFFINE))))
    wf = jnp.asarray(wf, jnp.float32)                  # (H, IN_AFFINE)
    bf = jnp.zeros((H,), jnp.float32)

    # ScaleLayerAffine: kron(eye(D), ones(1, H//D)/(H//D)), bias 0
    ws = jnp.asarray(np.kron(np.eye(D), np.ones((1, H // D)) / (H // D)),
                     jnp.float32)                      # (D, H)
    bs = jnp.zeros((D,), jnp.float32)

    # LSTMNetBlock: xavier_normal weights, bias = [-4, -4, 0, 0] blocks (both biases)
    bias = jnp.concatenate([jnp.full((H,), -4.0), jnp.full((H,), -4.0),
                            jnp.zeros((H,)), jnp.zeros((H,))]).astype(jnp.float32)
    std = math.sqrt(2.0 / (H + 4 * H))                 # xavier_normal_ for (4H, H)
    lstm = []
    for kl in k_lstm:
        k1, k2 = jax.random.split(kl)
        wih = (std * jax.random.normal(k1, (4 * H, H))).astype(jnp.float32)
        whh = (std * jax.random.normal(k2, (4 * H, H))).astype(jnp.float32)
        lstm.append((wih, whh, bias, bias))
    return (wf, bf), (ws, bs), lstm


def pack_params(params):
    """One-time host-side pre-transpose / pad / gate-reorder / bf16 cast."""
    (wf, bf), (ws, bs), lstm = params

    # Torch gate order is [i, f, g, o]; reorder to [i, f, o, g] so the kernel
    # applies one sigmoid over the first 3H columns and one tanh over the last H.
    perm = np.concatenate([np.arange(0, H), np.arange(H, 2 * H),
                           np.arange(3 * H, 4 * H), np.arange(2 * H, 3 * H)])

    # W_fuse^T, zero-row padded so the lane-padded x_k multiplies it directly.
    wf_t = (jnp.zeros((D_PAD, H), jnp.float32)
            .at[:IN_AFFINE, :].set(wf.T)).astype(jnp.bfloat16)
    bf2 = bf.reshape(1, H)

    wih_l, whh_l, bg_l = [], [], []
    for (wih, whh, bih, bhh) in lstm:
        wih_l.append(wih.T[:, perm])                       # (H, 4H), cols reordered
        whh_l.append(whh.T[:, perm])                       # (H, 4H)
        bg_l.append((bih + bhh)[perm].reshape(1, 4 * H))   # pre-summed bias
    wih_s = jnp.stack(wih_l, axis=0).astype(jnp.bfloat16)  # (L, H, 4H)
    whh_s = jnp.stack(whh_l, axis=0).astype(jnp.bfloat16)  # (L, H, 4H)
    bg_s = jnp.stack(bg_l, axis=0).astype(jnp.float32)     # (L, 1, 4H)

    # W_scale^T, zero-col lane-padded so delta is a full 128-lane tile.
    ws_t = (jnp.zeros((H, D_PAD), jnp.float32)
            .at[:, :D].set(ws.T)).astype(jnp.bfloat16)
    bs_p = jnp.zeros((1, D_PAD), jnp.float32).at[0, :D].set(bs)

    return wf_t, bf2, wih_s, whh_s, bg_s, ws_t, bs_p


def make_hidden_state():
    """init_hidden_state: np.random.RandomState(45).uniform(0,1,(B,H)) twice.
    Computed once (deterministic), padded to (B_PAD, H), kept on device."""
    rng = np.random.RandomState(45)
    h0 = np.zeros((B_PAD, H), np.float32)
    c0 = np.zeros((B_PAD, H), np.float32)
    h0[:B] = rng.uniform(0, 1, (B, H))
    c0[:B] = rng.uniform(0, 1, (B, H))
    return jnp.asarray(h0), jnp.asarray(c0)


def metanet_forward(x, packed, h0p, c0p):
    # One fused kernel call for all layers.
    xk_all = _run_fused(x, h0p, c0p, *packed)            # (L, B_PAD, D_PAD)

    # Bookkeeping identical to BaseNet._expand_list / _eval_func.
    xk_list, fk_list, gk_list = [], [], []
    x_k = x
    fx, gx = eval_fcn(x_k)
    xk_list.append(x_k)
    fk_list.append(jnp.sum(fx, axis=1))
    gk_list.append(gx)
    for layer in range(NUM_LAYERS):
        x_k = xk_all[layer, :B, :D]
        fx, gx = eval_fcn(x_k)
        xk_list.append(x_k)
        fk_list.append(jnp.sum(fx, axis=1))
        gk_list.append(gx)
    return xk_list, fk_list, gk_list


if __name__ == "__main__":
    key = jax.random.PRNGKey(0)
    kx, kp = jax.random.split(key)
    x = jax.random.normal(kx, (B, D), jnp.float32)

    packed = pack_params(init_params(kp))     # one-time host packing
    h0p, c0p = make_hidden_state()            # hoisted out of the per-call path

    xk_out, fk_out, gk_out = metanet_forward(x, packed, h0p, c0p)
    jax.block_until_ready(xk_out[-1])
    jax.block_until_ready(fk_out[-1])
    jax.block_until_ready(gk_out[-1])
    print("KERNEL_OK")
</pallas_src>

<mosaic_0001>
module attributes {stable_mosaic.version = 11 : i64} {
  func.func @_metanet_fused_kernel(%arg0: memref<8x128xf32, #tpu.memory_space<vmem>>, %arg1: memref<8x128xf32, #tpu.memory_space<vmem>>, %arg2: memref<8x128xf32, #tpu.memory_space<vmem>>, %arg3: memref<128x128xbf16, #tpu.memory_space<vmem>>, %arg4: memref<1x128xf32, #tpu.memory_space<vmem>>, %arg5: memref<3x128x512xbf16, #tpu.memory_space<vmem>>, %arg6: memref<3x128x512xbf16, #tpu.memory_space<vmem>>, %arg7: memref<3x1x512xf32, #tpu.memory_space<vmem>>, %arg8: memref<128x128xbf16, #tpu.memory_space<vmem>>, %arg9: memref<1x128xf32, #tpu.memory_space<vmem>>, %arg10: memref<3x8x128xf32, #tpu.memory_space<vmem>>) attributes {dimension_semantics = [], scalar_prefetch = 0 : i64, scratch_operands = 0 : i64, tpu.core_type = #tpu.core_type<tc>} {
    %c0 = arith.constant 0 : index
    %c0_0 = arith.constant 0 : index
    %0 = vector.load %arg0[%c0, %c0_0] : memref<8x128xf32, #tpu.memory_space<vmem>>, vector<8x128xf32>
    %c0_1 = arith.constant 0 : index
    %c0_2 = arith.constant 0 : index
    %1 = vector.load %arg1[%c0_1, %c0_2] : memref<8x128xf32, #tpu.memory_space<vmem>>, vector<8x128xf32>
    %c0_3 = arith.constant 0 : index
    %c0_4 = arith.constant 0 : index
    %2 = vector.load %arg2[%c0_3, %c0_4] : memref<8x128xf32, #tpu.memory_space<vmem>>, vector<8x128xf32>
    %c0_5 = arith.constant 0 : index
    %c0_6 = arith.constant 0 : index
    %3 = vector.load %arg3[%c0_5, %c0_6] : memref<128x128xbf16, #tpu.memory_space<vmem>>, vector<128x128xbf16>
    %c0_7 = arith.constant 0 : index
    %c0_8 = arith.constant 0 : index
    %4 = vector.load %arg4[%c0_7, %c0_8] : memref<1x128xf32, #tpu.memory_space<vmem>>, vector<1x128xf32>
    %c0_9 = arith.constant 0 : index
    %c0_10 = arith.constant 0 : index
    %5 = vector.load %arg8[%c0_9, %c0_10] : memref<128x128xbf16, #tpu.memory_space<vmem>>, vector<128x128xbf16>
    %c0_11 = arith.constant 0 : index
    %c0_12 = arith.constant 0 : index
    %6 = vector.load %arg9[%c0_11, %c0_12] : memref<1x128xf32, #tpu.memory_space<vmem>>, vector<1x128xf32>
    %7 = arith.truncf %0 : vector<8x128xf32> to vector<8x128xbf16>
    %cst = arith.constant dense<0.000000e+00> : vector<8x128xf32>
    %8 = tpu.matmul %7, %3, %cst {dimension_numbers = #tpu.dot_dimension_numbers<[1], [0], [0], [1], [0, 0, 1, 1], [], []>} : vector<8x128xbf16>, vector<128x128xbf16>, vector<8x128xf32> -> vector<8x128xf32>
    %9 = vector.broadcast %4 : vector<1x128xf32> to vector<8x128xf32>
    %10 = arith.addf %8, %9 : vector<8x128xf32>
    %11 = arith.truncf %10 : vector<8x128xf32> to vector<8x128xbf16>
    %c0_13 = arith.constant 0 : index
    %c0_14 = arith.constant 0 : index
    %c0_15 = arith.constant 0 : index
    %12 = vector.load %arg5[%c0_13, %c0_14, %c0_15] : memref<3x128x512xbf16, #tpu.memory_space<vmem>>, vector<1x128x512xbf16>
    %13 = vector.shape_cast %12 : vector<1x128x512xbf16> to vector<128x512xbf16>
    %cst_16 = arith.constant dense<0.000000e+00> : vector<8x512xf32>
    %14 = tpu.matmul %11, %13, %cst_16 {dimension_numbers = #tpu.dot_dimension_numbers<[1], [0], [0], [1], [0, 0, 1, 1], [], []>} : vector<8x128xbf16>, vector<128x512xbf16>, vector<8x512xf32> -> vector<8x512xf32>
    %15 = arith.truncf %1 : vector<8x128xf32> to vector<8x128xbf16>
    %c0_17 = arith.constant 0 : index
    %c0_18 = arith.constant 0 : index
    %c0_19 = arith.constant 0 : index
    %16 = vector.load %arg6[%c0_17, %c0_18, %c0_19] : memref<3x128x512xbf16, #tpu.memory_space<vmem>>, vector<1x128x512xbf16>
    %17 = vector.shape_cast %16 : vector<1x128x512xbf16> to vector<128x512xbf16>
    %cst_20 = arith.constant dense<0.000000e+00> : vector<8x512xf32>
    %18 = tpu.matmul %15, %17, %cst_20 {dimension_numbers = #tpu.dot_dimension_numbers<[1], [0], [0], [1], [0, 0, 1, 1], [], []>} : vector<8x128xbf16>, vector<128x512xbf16>, vector<8x512xf32> -> vector<8x512xf32>
    %19 = arith.addf %14, %18 : vector<8x512xf32>
    %c0_21 = arith.constant 0 : index
    %c0_22 = arith.constant 0 : index
    %c0_23 = arith.constant 0 : index
    %20 = vector.load %arg7[%c0_21, %c0_22, %c0_23] : memref<3x1x512xf32, #tpu.memory_space<vmem>>, vector<1x1x512xf32>
    %21 = vector.shape_cast %20 : vector<1x1x512xf32> to vector<1x512xf32>
    %22 = vector.broadcast %21 : vector<1x512xf32> to vector<8x512xf32>
    %23 = arith.addf %19, %22 : vector<8x512xf32>
    %24 = vector.extract_strided_slice %23 {offsets = [0, 0], sizes = [8, 384], strides = [1, 1]} : vector<8x512xf32> to vector<8x384xf32>
    %25 = arith.negf %24 : vector<8x384xf32>
    %26 = math.exp %25 : vector<8x384xf32>
    %cst_24 = arith.constant 1.000000e+00 : f32
    %27 = vector.broadcast %cst_24 : f32 to vector<8x384xf32>
    %28 = arith.addf %27, %26 : vector<8x384xf32>
    %29 = arith.divf %27, %28 : vector<8x384xf32>
    %30 = vector.extract_strided_slice %23 {offsets = [0, 384], sizes = [8, 128], strides = [1, 1]} : vector<8x512xf32> to vector<8x128xf32>
    %31 = math.tanh %30 : vector<8x128xf32>
    %32 = vector.extract_strided_slice %29 {offsets = [0, 0], sizes = [8, 128], strides = [1, 1]} : vector<8x384xf32> to vector<8x128xf32>
    %33 = vector.extract_strided_slice %29 {offsets = [0, 128], sizes = [8, 128], strides = [1, 1]} : vector<8x384xf32> to vector<8x128xf32>
    %34 = vector.extract_strided_slice %29 {offsets = [0, 256], sizes = [8, 128], strides = [1, 1]} : vector<8x384xf32> to vector<8x128xf32>
    %35 = arith.mulf %33, %2 : vector<8x128xf32>
    %36 = arith.mulf %32, %31 : vector<8x128xf32>
    %37 = arith.addf %35, %36 : vector<8x128xf32>
    %38 = math.tanh %37 : vector<8x128xf32>
    %39 = arith.mulf %34, %38 : vector<8x128xf32>
    %40 = arith.truncf %37 : vector<8x128xf32> to vector<8x128xbf16>
    %cst_25 = arith.constant dense<0.000000e+00> : vector<8x128xf32>
    %41 = tpu.matmul %40, %5, %cst_25 {dimension_numbers = #tpu.dot_dimension_numbers<[1], [0], [0], [1], [0, 0, 1, 1], [], []>} : vector<8x128xbf16>, vector<128x128xbf16>, vector<8x128xf32> -> vector<8x128xf32>
    %42 = vector.broadcast %6 : vector<1x128xf32> to vector<8x128xf32>
    %43 = arith.addf %41, %42 : vector<8x128xf32>
    %44 = arith.addf %0, %43 : vector<8x128xf32>
    %c0_26 = arith.constant 0 : index
    %c0_27 = arith.constant 0 : index
    %c0_28 = arith.constant 0 : index
    %45 = vector.load %arg10[%c0_26, %c0_27, %c0_28] : memref<3x8x128xf32, #tpu.memory_space<vmem>>, vector<1x8x128xf32>
    %46 = vector.shape_cast %45 : vector<1x8x128xf32> to vector<8x128xf32>
    %47 = vector.shape_cast %44 : vector<8x128xf32> to vector<1x8x128xf32>
    tpu.vector_store %arg10[%c0_26, %c0_27, %c0_28], %47 {strides = array<i32>} : memref<3x8x128xf32, #tpu.memory_space<vmem>>, vector<1x8x128xf32>,
    %48 = arith.truncf %44 : vector<8x128xf32> to vector<8x128xbf16>
    %cst_29 = arith.constant dense<0.000000e+00> : vector<8x128xf32>
    %49 = tpu.matmul %48, %3, %cst_29 {dimension_numbers = #tpu.dot_dimension_numbers<[1], [0], [0], [1], [0, 0, 1, 1], [], []>} : vector<8x128xbf16>, vector<128x128xbf16>, vector<8x128xf32> -> vector<8x128xf32>
    %50 = vector.broadcast %4 : vector<1x128xf32> to vector<8x128xf32>
    %51 = arith.addf %49, %50 : vector<8x128xf32>
    %52 = arith.truncf %51 : vector<8x128xf32> to vector<8x128xbf16>
    %c1 = arith.constant 1 : index
    %c0_30 = arith.constant 0 : index
    %c0_31 = arith.constant 0 : index
    %53 = vector.load %arg5[%c1, %c0_30, %c0_31] : memref<3x128x512xbf16, #tpu.memory_space<vmem>>, vector<1x128x512xbf16>
    %54 = vector.shape_cast %53 : vector<1x128x512xbf16> to vector<128x512xbf16>
    %cst_32 = arith.constant dense<0.000000e+00> : vector<8x512xf32>
    %55 = tpu.matmul %52, %54, %cst_32 {dimension_numbers = #tpu.dot_dimension_numbers<[1], [0], [0], [1], [0, 0, 1, 1], [], []>} : vector<8x128xbf16>, vector<128x512xbf16>, vector<8x512xf32> -> vector<8x512xf32>
    %56 = arith.truncf %39 : vector<8x128xf32> to vector<8x128xbf16>
    %c1_33 = arith.constant 1 : index
    %c0_34 = arith.constant 0 : index
    %c0_35 = arith.constant 0 : index
    %57 = vector.load %arg6[%c1_33, %c0_34, %c0_35] : memref<3x128x512xbf16, #tpu.memory_space<vmem>>, vector<1x128x512xbf16>
    %58 = vector.shape_cast %57 : vector<1x128x512xbf16> to vector<128x512xbf16>
    %cst_36 = arith.constant dense<0.000000e+00> : vector<8x512xf32>
    %59 = tpu.matmul %56, %58, %cst_36 {dimension_numbers = #tpu.dot_dimension_numbers<[1], [0], [0], [1], [0, 0, 1, 1], [], []>} : vector<8x128xbf16>, vector<128x512xbf16>, vector<8x512xf32> -> vector<8x512xf32>
    %60 = arith.addf %55, %59 : vector<8x512xf32>
    %c1_37 = arith.constant 1 : index
    %c0_38 = arith.constant 0 : index
    %c0_39 = arith.constant 0 : index
    %61 = vector.load %arg7[%c1_37, %c0_38, %c0_39] : memref<3x1x512xf32, #tpu.memory_space<vmem>>, vector<1x1x512xf32>
    %62 = vector.shape_cast %61 : vector<1x1x512xf32> to vector<1x512xf32>
    %63 = vector.broadcast %62 : vector<1x512xf32> to vector<8x512xf32>
    %64 = arith.addf %60, %63 : vector<8x512xf32>
    %65 = vector.extract_strided_slice %64 {offsets = [0, 0], sizes = [8, 384], strides = [1, 1]} : vector<8x512xf32> to vector<8x384xf32>
    %66 = arith.negf %65 : vector<8x384xf32>
    %67 = math.exp %66 : vector<8x384xf32>
    %cst_40 = arith.constant 1.000000e+00 : f32
    %68 = vector.broadcast %cst_40 : f32 to vector<8x384xf32>
    %69 = arith.addf %68, %67 : vector<8x384xf32>
    %70 = arith.divf %68, %69 : vector<8x384xf32>
    %71 = vector.extract_strided_slice %64 {offsets = [0, 384], sizes = [8, 128], strides = [1, 1]} : vector<8x512xf32> to vector<8x128xf32>
    %72 = math.tanh %71 : vector<8x128xf32>
    %73 = vector.extract_strided_slice %70 {offsets = [0, 0], sizes = [8, 128], strides = [1, 1]} : vector<8x384xf32> to vector<8x128xf32>
    %74 = vector.extract_strided_slice %70 {offsets = [0, 128], sizes = [8, 128], strides = [1, 1]} : vector<8x384xf32> to vector<8x128xf32>
    %75 = vector.extract_strided_slice %70 {offsets = [0, 256], sizes = [8, 128], strides = [1, 1]} : vector<8x384xf32> to vector<8x128xf32>
    %76 = arith.mulf %74, %37 : vector<8x128xf32>
    %77 = arith.mulf %73, %72 : vector<8x128xf32>
    %78 = arith.addf %76, %77 : vector<8x128xf32>
    %79 = math.tanh %78 : vector<8x128xf32>
    %80 = arith.mulf %75, %79 : vector<8x128xf32>
    %81 = arith.truncf %78 : vector<8x128xf32> to vector<8x128xbf16>
    %cst_41 = arith.constant dense<0.000000e+00> : vector<8x128xf32>
    %82 = tpu.matmul %81, %5, %cst_41 {dimension_numbers = #tpu.dot_dimension_numbers<[1], [0], [0], [1], [0, 0, 1, 1], [], []>} : vector<8x128xbf16>, vector<128x128xbf16>, vector<8x128xf32> -> vector<8x128xf32>
    %83 = vector.broadcast %6 : vector<1x128xf32> to vector<8x128xf32>
    %84 = arith.addf %82, %83 : vector<8x128xf32>
    %85 = arith.addf %44, %84 : vector<8x128xf32>
    %c1_42 = arith.constant 1 : index
    %c0_43 = arith.constant 0 : index
    %c0_44 = arith.constant 0 : index
    %86 = vector.load %arg10[%c1_42, %c0_43, %c0_44] : memref<3x8x128xf32, #tpu.memory_space<vmem>>, vector<1x8x128xf32>
    %87 = vector.shape_cast %86 : vector<1x8x128xf32> to vector<8x128xf32>
    %88 = vector.shape_cast %85 : vector<8x128xf32> to vector<1x8x128xf32>
    tpu.vector_store %arg10[%c1_42, %c0_43, %c0_44], %88 {strides = array<i32>} : memref<3x8x128xf32, #tpu.memory_space<vmem>>, vector<1x8x128xf32>,
    %89 = arith.truncf %85 : vector<8x128xf32> to vector<8x128xbf16>
    %cst_45 = arith.constant dense<0.000000e+00> : vector<8x128xf32>
    %90 = tpu.matmul %89, %3, %cst_45 {dimension_numbers = #tpu.dot_dimension_numbers<[1], [0], [0], [1], [0, 0, 1, 1], [], []>} : vector<8x128xbf16>, vector<128x128xbf16>, vector<8x128xf32> -> vector<8x128xf32>
    %91 = vector.broadcast %4 : vector<1x128xf32> to vector<8x128xf32>
    %92 = arith.addf %90, %91 : vector<8x128xf32>
    %93 = arith.truncf %92 : vector<8x128xf32> to vector<8x128xbf16>
    %c2 = arith.constant 2 : index
    %c0_46 = arith.constant 0 : index
    %c0_47 = arith.constant 0 : index
    %94 = vector.load %arg5[%c2, %c0_46, %c0_47] : memref<3x128x512xbf16, #tpu.memory_space<vmem>>, vector<1x128x512xbf16>
    %95 = vector.shape_cast %94 : vector<1x128x512xbf16> to vector<128x512xbf16>
    %cst_48 = arith.constant dense<0.000000e+00> : vector<8x512xf32>
    %96 = tpu.matmul %93, %95, %cst_48 {dimension_numbers = #tpu.dot_dimension_numbers<[1], [0], [0], [1], [0, 0, 1, 1], [], []>} : vector<8x128xbf16>, vector<128x512xbf16>, vector<8x512xf32> -> vector<8x512xf32>
    %97 = arith.truncf %80 : vector<8x128xf32> to vector<8x128xbf16>
    %c2_49 = arith.constant 2 : index
    %c0_50 = arith.constant 0 : index
    %c0_51 = arith.constant 0 : index
    %98 = vector.load %arg6[%c2_49, %c0_50, %c0_51] : memref<3x128x512xbf16, #tpu.memory_space<vmem>>, vector<1x128x512xbf16>
    %99 = vector.shape_cast %98 : vector<1x128x512xbf16> to vector<128x512xbf16>
    %cst_52 = arith.constant dense<0.000000e+00> : vector<8x512xf32>
    %100 = tpu.matmul %97, %99, %cst_52 {dimension_numbers = #tpu.dot_dimension_numbers<[1], [0], [0], [1], [0, 0, 1, 1], [], []>} : vector<8x128xbf16>, vector<128x512xbf16>, vector<8x512xf32> -> vector<8x512xf32>
    %101 = arith.addf %96, %100 : vector<8x512xf32>
    %c2_53 = arith.constant 2 : index
    %c0_54 = arith.constant 0 : index
    %c0_55 = arith.constant 0 : index
    %102 = vector.load %arg7[%c2_53, %c0_54, %c0_55] : memref<3x1x512xf32, #tpu.memory_space<vmem>>, vector<1x1x512xf32>
    %103 = vector.shape_cast %102 : vector<1x1x512xf32> to vector<1x512xf32>
    %104 = vector.broadcast %103 : vector<1x512xf32> to vector<8x512xf32>
    %105 = arith.addf %101, %104 : vector<8x512xf32>
    %106 = vector.extract_strided_slice %105 {offsets = [0, 0], sizes = [8, 384], strides = [1, 1]} : vector<8x512xf32> to vector<8x384xf32>
    %107 = arith.negf %106 : vector<8x384xf32>
    %108 = math.exp %107 : vector<8x384xf32>
    %cst_56 = arith.constant 1.000000e+00 : f32
    %109 = vector.broadcast %cst_56 : f32 to vector<8x384xf32>
    %110 = arith.addf %109, %108 : vector<8x384xf32>
    %111 = arith.divf %109, %110 : vector<8x384xf32>
    %112 = vector.extract_strided_slice %105 {offsets = [0, 384], sizes = [8, 128], strides = [1, 1]} : vector<8x512xf32> to vector<8x128xf32>
    %113 = math.tanh %112 : vector<8x128xf32>
    %114 = vector.extract_strided_slice %111 {offsets = [0, 0], sizes = [8, 128], strides = [1, 1]} : vector<8x384xf32> to vector<8x128xf32>
    %115 = vector.extract_strided_slice %111 {offsets = [0, 128], sizes = [8, 128], strides = [1, 1]} : vector<8x384xf32> to vector<8x128xf32>
    %116 = arith.mulf %115, %78 : vector<8x128xf32>
    %117 = arith.mulf %114, %113 : vector<8x128xf32>
    %118 = arith.addf %116, %117 : vector<8x128xf32>
    %119 = arith.truncf %118 : vector<8x128xf32> to vector<8x128xbf16>
    %cst_57 = arith.constant dense<0.000000e+00> : vector<8x128xf32>
    %120 = tpu.matmul %119, %5, %cst_57 {dimension_numbers = #tpu.dot_dimension_numbers<[1], [0], [0], [1], [0, 0, 1, 1], [], []>} : vector<8x128xbf16>, vector<128x128xbf16>, vector<8x128xf32> -> vector<8x128xf32>
    %121 = vector.broadcast %6 : vector<1x128xf32> to vector<8x128xf32>
    %122 = arith.addf %120, %121 : vector<8x128xf32>
    %123 = arith.addf %85, %122 : vector<8x128xf32>
    %c2_58 = arith.constant 2 : index
    %c0_59 = arith.constant 0 : index
    %c0_60 = arith.constant 0 : index
    %124 = vector.load %arg10[%c2_58, %c0_59, %c0_60] : memref<3x8x128xf32, #tpu.memory_space<vmem>>, vector<1x8x128xf32>
    %125 = vector.shape_cast %124 : vector<1x8x128xf32> to vector<8x128xf32>
    %126 = vector.shape_cast %123 : vector<8x128xf32> to vector<1x8x128xf32>
    tpu.vector_store %arg10[%c2_58, %c0_59, %c0_60], %126 {strides = array<i32>} : memref<3x8x128xf32, #tpu.memory_space<vmem>>, vector<1x8x128xf32>,
    return
  }
}

</mosaic_0001>

<llo_original>
// kernel: _run_fused.1
$region0: #{_run_fused.1}
  #allocation0 [shape = 'u32[]', space=smem, size = 0x4, offset = 0x4, fixed_abs, tag = 'smem constant byte address 0x4 - core index']
  #allocation1 [shape = 'u32[72,128]{1,0:T(1,128)}', space=vmem, size = 0x9000, scoped, tag = 'internal scratch']
  %s0 = inlined_call_operand.vmem [shape: f32[8,128], index: 0, kind: input, shape index: {}]
  %s1 = inlined_call_operand.hbm [shape: f32[8,128], index: 1, kind: input, shape index: {}]
  %s2 = inlined_call_operand.hbm [shape: f32[8,128], index: 2, kind: input, shape index: {}]
  %s3 = inlined_call_operand.hbm [shape: bf16[128,128], index: 3, kind: input, shape index: {}]
  %s4 = inlined_call_operand.vmem [shape: f32[1,128], index: 4, kind: input, shape index: {}]
  %s5 = inlined_call_operand.hbm [shape: bf16[3,128,512], index: 5, kind: input, shape index: {}]
  %s6 = inlined_call_operand.hbm [shape: bf16[3,128,512], index: 6, kind: input, shape index: {}]
  %s7 = inlined_call_operand.vmem [shape: f32[3,1,512], index: 7, kind: input, shape index: {}]
  %s8 = inlined_call_operand.hbm [shape: bf16[128,128], index: 8, kind: input, shape index: {}]
  %s9 = inlined_call_operand.vmem [shape: f32[1,128], index: 9, kind: input, shape index: {}]
  %s10 = inlined_call_operand.hbm [shape: f32[3,8,128], index: 10, kind: output, shape index: {}]
  %s11 = sld [smem:[#allocation0]]
  $region74: #{_run_fused.1} parent=0
    _
  %s13 = ssub.s32 1, %s11
  %s14 = scalar_select 0, %s13, %s11
  $region1: #{_run_fused.1} parent=0
    #allocation2 [shape = 'u8[4096]{0}', space=vmem, size = 0x1000, scoped, tag = 'input window, operand 1, single buffered']
    #allocation3 [shape = 's32[1]{0}', space=sflag, size = 0x4, scoped, tag = 'scoped memory for _run_fused.1']
    #allocation4 [shape = 's32[1]{0}', space=sflag, size = 0x4, scoped, tag = 'scoped memory for _run_fused.1']
    #allocation5 [shape = 'u8[4096]{0}', space=vmem, size = 0x1000, scoped, tag = 'input window, operand 2, single buffered']
    #allocation6 [shape = 's32[1]{0}', space=sflag, size = 0x4, scoped, tag = 'scoped memory for _run_fused.1']
    #allocation7 [shape = 'u8[32768]{0}', space=vmem, size = 0x8000, scoped, tag = 'input window, operand 3, single buffered']
    #allocation8 [shape = 'u8[393216]{0}', space=vmem, size = 0x60000, scoped, tag = 'input window, operand 5, single buffered']
    #allocation9 [shape = 's32[1]{0}', space=sflag, size = 0x4, scoped, tag = 'scoped memory for _run_fused.1']
    #allocation10 [shape = 'u8[393216]{0}', space=vmem, size = 0x60000, scoped, tag = 'input window, operand 6, single buffered']
    #allocation11 [shape = 'u8[32768]{0}', space=vmem, size = 0x8000, scoped, tag = 'input window, operand 8, single buffered']
    #allocation12 [shape = 's32[1]{0}', space=sflag, size = 0x4, scoped, tag = 'scoped memory for _run_fused.1']
    #allocation13 [shape = 'u8[12288]{0}', space=vmem, size = 0x3000, scoped, tag = 'output window, operand 0, single buffered']
    %15 = vsyncpa [#allocation3], 0
    %16 = vsyncpa [#allocation6], 0
    %17 = vsyncpa [#allocation9], 0
    %18 = vsyncpa [#allocation12], 0
    %19 = vsyncpa [#allocation4], 0
    // Predicated region
    $region2: #{_run_fused.1} parent=1 // pred_check
      _
    $region3: #{_run_fused.1} parent=1 // pred_check_branch
      %21 = sbr.rel (0) target = $region5
    $region4: #{_run_fused.1} parent=1 // pred_region
      _
    $region5: #{_run_fused.1} parent=1 // pred_fallthru
      _
    // Predicated region
    $region6: #{_run_fused.1} parent=1 // pred_check
      _
    $region7: #{_run_fused.1} parent=1 // pred_check_branch
      %23 = sbr.rel (0) target = $region9
    $region8: #{_run_fused.1} parent=1 // pred_region
      %25 = vsyncadd [#allocation3], 0
      %s27 = sshll.u32 %s1, 4
      %s28 = int_to_ptr.hbm [resolvable:$true] %s27
      %s29 = sshll.u32 [#allocation2], 4
      %s30 = int_to_ptr.vmem [resolvable:$true] %s29
      %32 = dma.hbm_to_vmem [thread:$0]  %s28, 128, %s30, [#allocation3]
    $region9: #{_run_fused.1} parent=1 // pred_fallthru
      _
    // Predicated region
    $region10: #{_run_fused.1} parent=1 // pred_check
      _
    $region11: #{_run_fused.1} parent=1 // pred_check_branch
      %34 = sbr.rel (0) target = $region13
    $region12: #{_run_fused.1} parent=1 // pred_region
      %36 = vsyncadd [#allocation6], 0
      %s38 = sshll.u32 %s2, 4
      %s39 = int_to_ptr.hbm [resolvable:$true] %s38
      %s40 = sshll.u32 [#allocation5], 4
      %s41 = int_to_ptr.vmem [resolvable:$true] %s40
      %43 = dma.hbm_to_vmem [thread:$0]  %s39, 128, %s41, [#allocation6]
    $region13: #{_run_fused.1} parent=1 // pred_fallthru
      _
    // Predicated region
    $region14: #{_run_fused.1} parent=1 // pred_check
      _
    $region15: #{_run_fused.1} parent=1 // pred_check_branch
      %45 = sbr.rel (0) target = $region17
    $region16: #{_run_fused.1} parent=1 // pred_region
      %47 = vsyncadd [#allocation6], 0
      %s48 = sshll.u32 %s3, 4
      %s49 = int_to_ptr.hbm [resolvable:$true] %s48
      %s50 = sshll.u32 [#allocation7], 4
      %s51 = int_to_ptr.vmem [resolvable:$true] %s50
      %56 = dma.hbm_to_vmem [thread:$0]  %s49, 1024, %s51, [#allocation6], 64, 64, 4
    $region17: #{_run_fused.1} parent=1 // pred_fallthru
      _
    // Predicated region
    $region18: #{_run_fused.1} parent=1 // pred_check
      _
    $region19: #{_run_fused.1} parent=1 // pred_check_branch
      %58 = sbr.rel (0) target = $region21
    $region20: #{_run_fused.1} parent=1 // pred_region
      _
    $region21: #{_run_fused.1} parent=1 // pred_fallthru
      _
    // Predicated region
    $region22: #{_run_fused.1} parent=1 // pred_check
      _
    $region23: #{_run_fused.1} parent=1 // pred_check_branch
      %60 = sbr.rel (0) target = $region25
    $region24: #{_run_fused.1} parent=1 // pred_region
      %62 = vsyncadd [#allocation9], 0
      %s63 = sshll.u32 %s5, 4
      %s64 = int_to_ptr.hbm [resolvable:$true] %s63
      %s65 = sshll.u32 [#allocation8], 4
      %s66 = int_to_ptr.vmem [resolvable:$true] %s65
      %71 = dma.hbm_to_vmem [thread:$0]  %s64, 12288, %s66, [#allocation9], 256, 256, 16
    $region25: #{_run_fused.1} parent=1 // pred_fallthru
      _
    // Predicated region
    $region26: #{_run_fused.1} parent=1 // pred_check
      _
    $region27: #{_run_fused.1} parent=1 // pred_check_branch
      %73 = sbr.rel (0) target = $region29
    $region28: #{_run_fused.1} parent=1 // pred_region
      %75 = vsyncadd [#allocation9], 0
      %s76 = sshll.u32 %s6, 4
      %s77 = int_to_ptr.hbm [resolvable:$true] %s76
      %s78 = sshll.u32 [#allocation10], 4
      %s79 = int_to_ptr.vmem [resolvable:$true] %s78
      %84 = dma.hbm_to_vmem [thread:$0]  %s77, 12288, %s79, [#allocation9], 256, 256, 16
    $region29: #{_run_fused.1} parent=1 // pred_fallthru
      _
    // Predicated region
    $region30: #{_run_fused.1} parent=1 // pred_check
      _
    $region31: #{_run_fused.1} parent=1 // pred_check_branch
      %86 = sbr.rel (0) target = $region33
    $region32: #{_run_fused.1} parent=1 // pred_region
      _
    $region33: #{_run_fused.1} parent=1 // pred_fallthru
      _
    // Predicated region
    $region34: #{_run_fused.1} parent=1 // pred_check
      _
    $region35: #{_run_fused.1} parent=1 // pred_check_branch
      %88 = sbr.rel (0) target = $region37
    $region36: #{_run_fused.1} parent=1 // pred_region
      %90 = vsyncadd [#allocation12], 0
      %s91 = sshll.u32 %s8, 4
      %s92 = int_to_ptr.hbm [resolvable:$true] %s91
      %s93 = sshll.u32 [#allocation11], 4
      %s94 = int_to_ptr.vmem [resolvable:$true] %s93
      %99 = dma.hbm_to_vmem [thread:$0]  %s92, 1024, %s94, [#allocation12], 64, 64, 4
    $region37: #{_run_fused.1} parent=1 // pred_fallthru
      _
    // Predicated region
    $region38: #{_run_fused.1} parent=1 // pred_check
      _
    $region39: #{_run_fused.1} parent=1 // pred_check_branch
      %101 = sbr.rel (0) target = $region41
    $region40: #{_run_fused.1} parent=1 // pred_region
      _
    $region41: #{_run_fused.1} parent=1 // pred_fallthru
      _
    // Predicated region
    $region42: #{_run_fused.1} parent=1 // pred_check
      _
    $region43: #{_run_fused.1} parent=1 // pred_check_branch
      %103 = sbr.rel (0) target = $region45
    $region44: #{_run_fused.1} parent=1 // pred_region
      %105 = dma.done [#allocation3], 128
    $region45: #{_run_fused.1} parent=1 // pred_fallthru
      _
    // Predicated region
    $region46: #{_run_fused.1} parent=1 // pred_check
      _
    $region47: #{_run_fused.1} parent=1 // pred_check_branch
      %107 = sbr.rel (0) target = $region49
    $region48: #{_run_fused.1} parent=1 // pred_region
      %109 = dma.done [#allocation6], 128
    $region49: #{_run_fused.1} parent=1 // pred_fallthru
      _
    // Predicated region
    $region50: #{_run_fused.1} parent=1 // pred_check
      _
    $region51: #{_run_fused.1} parent=1 // pred_check_branch
      %111 = sbr.rel (0) target = $region53
    $region52: #{_run_fused.1} parent=1 // pred_region
      %113 = dma.done [#allocation6], 1024
    $region53: #{_run_fused.1} parent=1 // pred_fallthru
      _
    // Predicated region
    $region54: #{_run_fused.1} parent=1 // pred_check
      _
    $region55: #{_run_fused.1} parent=1 // pred_check_branch
      %115 = sbr.rel (0) target = $region57
    $region56: #{_run_fused.1} parent=1 // pred_region
      %117 = dma.done [#allocation9], 12288
    $region57: #{_run_fused.1} parent=1 // pred_fallthru
      _
    // Predicated region
    $region58: #{_run_fused.1} parent=1 // pred_check
      _
    $region59: #{_run_fused.1} parent=1 // pred_check_branch
      %119 = sbr.rel (0) target = $region61
    $region60: #{_run_fused.1} parent=1 // pred_region
      %121 = dma.done [#allocation9], 12288
    $region61: #{_run_fused.1} parent=1 // pred_fallthru
      _
    // Predicated region
    $region62: #{_run_fused.1} parent=1 // pred_check
      _
    $region63: #{_run_fused.1} parent=1 // pred_check_branch
      %123 = sbr.rel (0) target = $region65
    $region64: #{_run_fused.1} parent=1 // pred_region
      %125 = dma.done [#allocation12], 1024
    $region65: #{_run_fused.1} parent=1 // pred_fallthru
      _
    %v126 = vld [vmem:[%s0] sm:$0xff]
    %v127 = vld [vmem:[#allocation2] sm:$0xff]
    %v128 = vld [vmem:[#allocation5] sm:$0xff]
    %v129 = vld [vmem:[#allocation7] sm:$0xf]
    %v130 = vld [vmem:[#allocation7 + $0x4] sm:$0xf]
    %v131 = vld [vmem:[#allocation7 + $0x8] sm:$0xf]
    %v132 = vld [vmem:[#allocation7 + $0xc] sm:$0xf]
    %v133 = vld [vmem:[#allocation7 + $0x10] sm:$0xf]
    %v134 = vld [vmem:[#allocation7 + $0x14] sm:$0xf]
    %v135 = vld [vmem:[#allocation7 + $0x18] sm:$0xf]
    %v136 = vld [vmem:[#allocation7 + $0x1c] sm:$0xf]
    %v137 = vld [vmem:[#allocation7 + $0x20] sm:$0xf]
    %v138 = vld [vmem:[#allocation7 + $0x24] sm:$0xf]
    %v139 = vld [vmem:[#allocation7 + $0x28] sm:$0xf]
    %v140 = vld [vmem:[#allocation7 + $0x2c] sm:$0xf]
    %v141 = vld [vmem:[#allocation7 + $0x30] sm:$0xf]
    %v142 = vld [vmem:[#allocation7 + $0x34] sm:$0xf]
    %v143 = vld [vmem:[#allocation7 + $0x38] sm:$0xf]
    %v144 = vld [vmem:[#allocation7 + $0x3c] sm:$0xf]
    %v145 = vld [vmem:[%s4] sm:$0x1]
    %v146 = vld [vmem:[#allocation11] sm:$0xf]
    %v147 = vld [vmem:[#allocation11 + $0x4] sm:$0xf]
    %v148 = vld [vmem:[#allocation11 + $0x8] sm:$0xf]
    %v149 = vld [vmem:[#allocation11 + $0xc] sm:$0xf]
    %v150 = vld [vmem:[#allocation11 + $0x10] sm:$0xf]
    %v151 = vld [vmem:[#allocation11 + $0x14] sm:$0xf]
    %v152 = vld [vmem:[#allocation11 + $0x18] sm:$0xf]
    %v153 = vld [vmem:[#allocation11 + $0x1c] sm:$0xf]
    %v154 = vld [vmem:[#allocation11 + $0x20] sm:$0xf]
    %v155 = vld [vmem:[#allocation11 + $0x24] sm:$0xf]
    %v156 = vld [vmem:[#allocation11 + $0x28] sm:$0xf]
    %v157 = vld [vmem:[#allocation11 + $0x2c] sm:$0xf]
    %v158 = vld [vmem:[#allocation11 + $0x30] sm:$0xf]
    %v159 = vld [vmem:[#allocation11 + $0x34] sm:$0xf]
    %v160 = vld [vmem:[#allocation11 + $0x38] sm:$0xf]
    %v161 = vld [vmem:[#allocation11 + $0x3c] sm:$0xf]
    %v162 = vld [vmem:[%s9] sm:$0x1]
    %v163 = vpack.c.bf16 %v126, %v126
    %v165 = vperm.slane %v145, 0
    %v183 = vunpack.c.l.b16 %v129
    %v184 = vunpack.c.l.b16 %v130
    %v185 = vunpack.c.l.b16 %v131
    %v186 = vunpack.c.l.b16 %v132
    %v187 = vunpack.c.l.b16 %v133
    %v188 = vunpack.c.l.b16 %v134
    %v189 = vunpack.c.l.b16 %v135
    %v190 = vunpack.c.l.b16 %v136
    %v191 = vunpack.c.l.b16 %v137
    %v192 = vunpack.c.l.b16 %v138
    %v193 = vunpack.c.l.b16 %v139
    %v194 = vunpack.c.l.b16 %v140
    %v195 = vunpack.c.l.b16 %v141
    %v196 = vunpack.c.l.b16 %v142
    %v197 = vunpack.c.l.b16 %v143
    %v198 = vunpack.c.l.b16 %v144
    %v199 = vpack.c.b16 %v184, %v183
    %v200 = vpack.c.b16 %v186, %v185
    %v201 = vpack.c.b16 %v188, %v187
    %v202 = vpack.c.b16 %v190, %v189
    %v203 = vpack.c.b16 %v192, %v191
    %v204 = vpack.c.b16 %v194, %v193
    %v205 = vpack.c.b16 %v196, %v195
    %v206 = vpack.c.b16 %v198, %v197
    %215 = vmatpush.bf16.msra.mxu0 %v206
    %216 = vmatpush.bf16.msra.mxu0 %v205
    %217 = vmatpush.bf16.msra.mxu0 %v204
    %218 = vmatpush.bf16.msra.mxu0 %v203
    %219 = vmatpush.bf16.msra.mxu0 %v202
    %220 = vmatpush.bf16.msra.mxu0 %v201
    %221 = vmatpush.bf16.msra.mxu0 %v200
    %222 = vmatpush.bf16.msra.mxu0 %v199
    %223 = vmatmul.bf16.gmra.mxu0 %v163
    %v224 = vpop.f32.mrf.mxu0
    %v225 = vadd.f32 %v165, %v224
    %v226 = vpop.f32.mrf.mxu0
    %227 = vdwg.mxu0
    %v228 = vpack.c.bf16 %v225, %v225
    %v229 = vld [vmem:[#allocation8] sm:$0xff]
    %v230 = vld [vmem:[#allocation8 + $0x8] sm:$0xff]
    %v231 = vld [vmem:[#allocation8 + $0x10] sm:$0xff]
    %v232 = vld [vmem:[#allocation8 + $0x18] sm:$0xff]
    %v233 = vld [vmem:[#allocation8 + $0x20] sm:$0xff]
    %v234 = vld [vmem:[#allocation8 + $0x28] sm:$0xff]
    %v235 = vld [vmem:[#allocation8 + $0x30] sm:$0xff]
    %v236 = vld [vmem:[#allocation8 + $0x38] sm:$0xff]
    %v237 = vld [vmem:[#allocation8 + $0x40] sm:$0xff]
    %v238 = vld [vmem:[#allocation8 + $0x48] sm:$0xff]
    %v239 = vld [vmem:[#allocation8 + $0x50] sm:$0xff]
    %v240 = vld [vmem:[#allocation8 + $0x58] sm:$0xff]
    %v241 = vld [vmem:[#allocation8 + $0x60] sm:$0xff]
    %v242 = vld [vmem:[#allocation8 + $0x68] sm:$0xff]
    %v243 = vld [vmem:[#allocation8 + $0x70] sm:$0xff]
    %v244 = vld [vmem:[#allocation8 + $0x78] sm:$0xff]
    %v245 = vld [vmem:[#allocation8 + $0x80] sm:$0xff]
    %v246 = vld [vmem:[#allocation8 + $0x88] sm:$0xff]
    %v247 = vld [vmem:[#allocation8 + $0x90] sm:$0xff]
    %v248 = vld [vmem:[#allocation8 + $0x98] sm:$0xff]
    %v249 = vld [vmem:[#allocation8 + $0xa0] sm:$0xff]
    %v250 = vld [vmem:[#allocation8 + $0xa8] sm:$0xff]
    %v251 = vld [vmem:[#allocation8 + $0xb0] sm:$0xff]
    %v252 = vld [vmem:[#allocation8 + $0xb8] sm:$0xff]
    %v253 = vld [vmem:[#allocation8 + $0xc0] sm:$0xff]
    %v254 = vld [vmem:[#allocation8 + $0xc8] sm:$0xff]
    %v255 = vld [vmem:[#allocation8 + $0xd0] sm:$0xff]
    %v256 = vld [vmem:[#allocation8 + $0xd8] sm:$0xff]
    %v257 = vld [vmem:[#allocation8 + $0xe0] sm:$0xff]
    %v258 = vld [vmem:[#allocation8 + $0xe8] sm:$0xff]
    %v259 = vld [vmem:[#allocation8 + $0xf0] sm:$0xff]
    %v260 = vld [vmem:[#allocation8 + $0xf8] sm:$0xff]
    %v261 = vpack.c.bf16 %v127, %v127
    %v262 = vld [vmem:[#allocation10] sm:$0xff]
    %v263 = vld [vmem:[#allocation10 + $0x8] sm:$0xff]
    %v264 = vld [vmem:[#allocation10 + $0x10] sm:$0xff]
    %v265 = vld [vmem:[#allocation10 + $0x18] sm:$0xff]
    %v266 = vld [vmem:[#allocation10 + $0x20] sm:$0xff]
    %v267 = vld [vmem:[#allocation10 + $0x28] sm:$0xff]
    %v268 = vld [vmem:[#allocation10 + $0x30] sm:$0xff]
    %v269 = vld [vmem:[#allocation10 + $0x38] sm:$0xff]
    %v270 = vld [vmem:[#allocation10 + $0x40] sm:$0xff]
    %v271 = vld [vmem:[#allocation10 + $0x48] sm:$0xff]
    %v272 = vld [vmem:[#allocation10 + $0x50] sm:$0xff]
    %v273 = vld [vmem:[#allocation10 + $0x58] sm:$0xff]
    %v274 = vld [vmem:[#allocation10 + $0x60] sm:$0xff]
    %v275 = vld [vmem:[#allocation10 + $0x68] sm:$0xff]
    %v276 = vld [vmem:[#allocation10 + $0x70] sm:$0xff]
    %v277 = vld [vmem:[#allocation10 + $0x78] sm:$0xff]
    %v278 = vld [vmem:[#allocation10 + $0x80] sm:$0xff]
    %v279 = vld [vmem:[#allocation10 + $0x88] sm:$0xff]
    %v280 = vld [vmem:[#allocation10 + $0x90] sm:$0xff]
    %v281 = vld [vmem:[#allocation10 + $0x98] sm:$0xff]
    %v282 = vld [vmem:[#allocation10 + $0xa0] sm:$0xff]
    %v283 = vld [vmem:[#allocation10 + $0xa8] sm:$0xff]
    %v284 = vld [vmem:[#allocation10 + $0xb0] sm:$0xff]
    %v285 = vld [vmem:[#allocation10 + $0xb8] sm:$0xff]
    %v286 = vld [vmem:[#allocation10 + $0xc0] sm:$0xff]
    %v287 = vld [vmem:[#allocation10 + $0xc8] sm:$0xff]
    %v288 = vld [vmem:[#allocation10 + $0xd0] sm:$0xff]
    %v289 = vld [vmem:[#allocation10 + $0xd8] sm:$0xff]
    %v290 = vld [vmem:[#allocation10 + $0xe0] sm:$0xff]
    %v291 = vld [vmem:[#allocation10 + $0xe8] sm:$0xff]
    %v292 = vld [vmem:[#allocation10 + $0xf0] sm:$0xff]
    %v293 = vld [vmem:[#allocation10 + $0xf8] sm:$0xff]
    %v326 = vunpack.c.l.b16 %v262
    %v327 = vunpack.c.h.b16 %v262
    %v328 = vunpack.c.l.b16 %v263
    %v329 = vunpack.c.h.b16 %v263
    %v330 = vunpack.c.l.b16 %v264
    %v331 = vunpack.c.h.b16 %v264
    %v332 = vunpack.c.l.b16 %v265
    %v333 = vunpack.c.h.b16 %v265
    %v334 = vunpack.c.l.b16 %v266
    %v335 = vunpack.c.h.b16 %v266
    %v336 = vunpack.c.l.b16 %v267
    %v337 = vunpack.c.h.b16 %v267
    %v338 = vunpack.c.l.b16 %v268
    %v339 = vunpack.c.h.b16 %v268
    %v340 = vunpack.c.l.b16 %v269
    %v341 = vunpack.c.h.b16 %v269
    %v342 = vunpack.c.l.b16 %v270
    %v343 = vunpack.c.h.b16 %v270
    %v344 = vunpack.c.l.b16 %v271
    %v345 = vunpack.c.h.b16 %v271
    %v346 = vunpack.c.l.b16 %v272
    %v347 = vunpack.c.h.b16 %v272
    %v348 = vunpack.c.l.b16 %v273
    %v349 = vunpack.c.h.b16 %v273
    %v350 = vunpack.c.l.b16 %v274
    %v351 = vunpack.c.h.b16 %v274
    %v352 = vunpack.c.l.b16 %v275
    %v353 = vunpack.c.h.b16 %v275
    %v354 = vunpack.c.l.b16 %v276
    %v355 = vunpack.c.h.b16 %v276
    %v356 = vunpack.c.l.b16 %v277
    %v357 = vunpack.c.h.b16 %v277
    %v358 = vunpack.c.l.b16 %v278
    %v359 = vunpack.c.h.b16 %v278
    %v360 = vunpack.c.l.b16 %v279
    %v361 = vunpack.c.h.b16 %v279
    %v362 = vunpack.c.l.b16 %v280
    %v363 = vunpack.c.h.b16 %v280
    %v364 = vunpack.c.l.b16 %v281
    %v365 = vunpack.c.h.b16 %v281
    %v366 = vunpack.c.l.b16 %v282
    %v367 = vunpack.c.h.b16 %v282
    %v368 = vunpack.c.l.b16 %v283
    %v369 = vunpack.c.h.b16 %v283
    %v370 = vunpack.c.l.b16 %v284
    %v371 = vunpack.c.h.b16 %v284
    %v372 = vunpack.c.l.b16 %v285
    %v373 = vunpack.c.h.b16 %v285
    %v374 = vunpack.c.l.b16 %v286
    %v375 = vunpack.c.h.b16 %v286
    %v376 = vunpack.c.l.b16 %v287
    %v377 = vunpack.c.h.b16 %v287
    %v378 = vunpack.c.l.b16 %v288
    %v379 = vunpack.c.h.b16 %v288
    %v380 = vunpack.c.l.b16 %v289
    %v381 = vunpack.c.h.b16 %v289
    %v382 = vunpack.c.l.b16 %v290
    %v383 = vunpack.c.h.b16 %v290
    %v384 = vunpack.c.l.b16 %v291
    %v385 = vunpack.c.h.b16 %v291
    %v386 = vunpack.c.l.b16 %v292
    %v387 = vunpack.c.h.b16 %v292
    %v388 = vunpack.c.l.b16 %v293
    %v389 = vunpack.c.h.b16 %v293
    %v390 = vpack.c.b16 %v330, %v326
    %v391 = vpack.c.b16 %v331, %v327
    %v392 = vpack.c.b16 %v332, %v328
    %v393 = vpack.c.b16 %v333, %v329
    %v394 = vpack.c.b16 %v338, %v334
    %v395 = vpack.c.b16 %v339, %v335
    %v396 = vpack.c.b16 %v340, %v336
    %v397 = vpack.c.b16 %v341, %v337
    %v398 = vpack.c.b16 %v346, %v342
    %v399 = vpack.c.b16 %v347, %v343
    %v400 = vpack.c.b16 %v348, %v344
    %v401 = vpack.c.b16 %v349, %v345
    %v402 = vpack.c.b16 %v354, %v350
    %v403 = vpack.c.b16 %v355, %v351
    %v404 = vpack.c.b16 %v356, %v352
    %v405 = vpack.c.b16 %v357, %v353
    %v406 = vpack.c.b16 %v362, %v358
    %v407 = vpack.c.b16 %v363, %v359
    %v408 = vpack.c.b16 %v364, %v360
    %v409 = vpack.c.b16 %v365, %v361
    %v410 = vpack.c.b16 %v370, %v366
    %v411 = vpack.c.b16 %v371, %v367
    %v412 = vpack.c.b16 %v372, %v368
    %v413 = vpack.c.b16 %v373, %v369
    %v414 = vpack.c.b16 %v378, %v374
    %v415 = vpack.c.b16 %v379, %v375
    %v416 = vpack.c.b16 %v380, %v376
    %v417 = vpack.c.b16 %v381, %v377
    %v418 = vpack.c.b16 %v386, %v382
    %v419 = vpack.c.b16 %v387, %v383
    %v420 = vpack.c.b16 %v388, %v384
    %v421 = vpack.c.b16 %v389, %v385
    %454 = vmatpush.bf16.msra.mxu0 %v418
    %455 = vmatpush.bf16.msra.mxu0 %v414
    %456 = vmatpush.bf16.msra.mxu0 %v410
    %457 = vmatpush.bf16.msra.mxu0 %v406
    %458 = vmatpush.bf16.msra.mxu0 %v402
    %459 = vmatpush.bf16.msra.mxu0 %v398
    %460 = vmatpush.bf16.msra.mxu0 %v394
    %461 = vmatpush.bf16.msra.mxu0 %v390
    %462 = vmatmul.bf16.gmra.mxu0 %v261
    %v463 = vpop.f32.mrf.mxu0
    %v464 = vadd.f32 0.0, %v463
    %v465 = vpop.f32.mrf.mxu0
    %466 = vdwg.mxu0
    %467 = vmatpush.bf16.msra.mxu0 %v419
    %468 = vmatpush.bf16.msra.mxu0 %v415
    %469 = vmatpush.bf16.msra.mxu0 %v411
    %470 = vmatpush.bf16.msra.mxu0 %v407
    %471 = vmatpush.bf16.msra.mxu0 %v403
    %472 = vmatpush.bf16.msra.mxu0 %v399
    %473 = vmatpush.bf16.msra.mxu0 %v395
    %474 = vmatpush.bf16.msra.mxu0 %v391
    %475 = vmatmul.bf16.gmra.mxu0 %v261
    %v476 = vpop.f32.mrf.mxu0
    %v477 = vadd.f32 0.0, %v476
    %v478 = vpop.f32.mrf.mxu0
    %479 = vdwg.mxu0
    %480 = vmatpush.bf16.msra.mxu0 %v420
    %481 = vmatpush.bf16.msra.mxu0 %v416
    %482 = vmatpush.bf16.msra.mxu0 %v412
    %483 = vmatpush.bf16.msra.mxu0 %v408
    %484 = vmatpush.bf16.msra.mxu0 %v404
    %485 = vmatpush.bf16.msra.mxu0 %v400
    %486 = vmatpush.bf16.msra.mxu0 %v396
    %487 = vmatpush.bf16.msra.mxu0 %v392
    %488 = vmatmul.bf16.gmra.mxu0 %v261
    %v489 = vpop.f32.mrf.mxu0
    %v490 = vadd.f32 0.0, %v489
    %v491 = vpop.f32.mrf.mxu0
    %492 = vdwg.mxu0
    %493 = vmatpush.bf16.msra.mxu0 %v421
    %494 = vmatpush.bf16.msra.mxu0 %v417
    %495 = vmatpush.bf16.msra.mxu0 %v413
    %496 = vmatpush.bf16.msra.mxu0 %v409
    %497 = vmatpush.bf16.msra.mxu0 %v405
    %498 = vmatpush.bf16.msra.mxu0 %v401
    %499 = vmatpush.bf16.msra.mxu0 %v397
    %500 = vmatpush.bf16.msra.mxu0 %v393
    %501 = vmatmul.bf16.gmra.mxu0 %v261
    %v502 = vpop.f32.mrf.mxu0
    %v503 = vadd.f32 0.0, %v502
    %v504 = vpop.f32.mrf.mxu0
    %505 = vdwg.mxu0
    %v538 = vunpack.c.l.b16 %v229
    %v539 = vunpack.c.h.b16 %v229
    %v540 = vunpack.c.l.b16 %v230
    %v541 = vunpack.c.h.b16 %v230
    %v542 = vunpack.c.l.b16 %v231
    %v543 = vunpack.c.h.b16 %v231
    %v544 = vunpack.c.l.b16 %v232
    %v545 = vunpack.c.h.b16 %v232
    %v546 = vunpack.c.l.b16 %v233
    %v547 = vunpack.c.h.b16 %v233
    %v548 = vunpack.c.l.b16 %v234
    %v549 = vunpack.c.h.b16 %v234
    %v550 = vunpack.c.l.b16 %v235
    %v551 = vunpack.c.h.b16 %v235
    %v552 = vunpack.c.l.b16 %v236
    %v553 = vunpack.c.h.b16 %v236
    %v554 = vunpack.c.l.b16 %v237
    %v555 = vunpack.c.h.b16 %v237
    %v556 = vunpack.c.l.b16 %v238
    %v557 = vunpack.c.h.b16 %v238
    %v558 = vunpack.c.l.b16 %v239
    %v559 = vunpack.c.h.b16 %v239
    %v560 = vunpack.c.l.b16 %v240
    %v561 = vunpack.c.h.b16 %v240
    %v562 = vunpack.c.l.b16 %v241
    %v563 = vunpack.c.h.b16 %v241
    %v564 = vunpack.c.l.b16 %v242
    %v565 = vunpack.c.h.b16 %v242
    %v566 = vunpack.c.l.b16 %v243
    %v567 = vunpack.c.h.b16 %v243
    %v568 = vunpack.c.l.b16 %v244
    %v569 = vunpack.c.h.b16 %v244
    %v570 = vunpack.c.l.b16 %v245
    %v571 = vunpack.c.h.b16 %v245
    %v572 = vunpack.c.l.b16 %v246
    %v573 = vunpack.c.h.b16 %v246
    %v574 = vunpack.c.l.b16 %v247
    %v575 = vunpack.c.h.b16 %v247
    %v576 = vunpack.c.l.b16 %v248
    %v577 = vunpack.c.h.b16 %v248
    %v578 = vunpack.c.l.b16 %v249
    %v579 = vunpack.c.h.b16 %v249
    %v580 = vunpack.c.l.b16 %v250
    %v581 = vunpack.c.h.b16 %v250
    %v582 = vunpack.c.l.b16 %v251
    %v583 = vunpack.c.h.b16 %v251
    %v584 = vunpack.c.l.b16 %v252
    %v585 = vunpack.c.h.b16 %v252
    %v586 = vunpack.c.l.b16 %v253
    %v587 = vunpack.c.h.b16 %v253
    %v588 = vunpack.c.l.b16 %v254
    %v589 = vunpack.c.h.b16 %v254
    %v590 = vunpack.c.l.b16 %v255
    %v591 = vunpack.c.h.b16 %v255
    %v592 = vunpack.c.l.b16 %v256
    %v593 = vunpack.c.h.b16 %v256
    %v594 = vunpack.c.l.b16 %v257
    %v595 = vunpack.c.h.b16 %v257
    %v596 = vunpack.c.l.b16 %v258
    %v597 = vunpack.c.h.b16 %v258
    %v598 = vunpack.c.l.b16 %v259
    %v599 = vunpack.c.h.b16 %v259
    %v600 = vunpack.c.l.b16 %v260
    %v601 = vunpack.c.h.b16 %v260
    %v602 = vpack.c.b16 %v542, %v538
    %v603 = vpack.c.b16 %v543, %v539
    %v604 = vpack.c.b16 %v544, %v540
    %v605 = vpack.c.b16 %v545, %v541
    %v606 = vpack.c.b16 %v550, %v546
    %v607 = vpack.c.b16 %v551, %v547
    %v608 = vpack.c.b16 %v552, %v548
    %v609 = vpack.c.b16 %v553, %v549
    %v610 = vpack.c.b16 %v558, %v554
    %v611 = vpack.c.b16 %v559, %v555
    %v612 = vpack.c.b16 %v560, %v556
    %v613 = vpack.c.b16 %v561, %v557
    %v614 = vpack.c.b16 %v566, %v562
    %v615 = vpack.c.b16 %v567, %v563
    %v616 = vpack.c.b16 %v568, %v564
    %v617 = vpack.c.b16 %v569, %v565
    %v618 = vpack.c.b16 %v574, %v570
    %v619 = vpack.c.b16 %v575, %v571
    %v620 = vpack.c.b16 %v576, %v572
    %v621 = vpack.c.b16 %v577, %v573
    %v622 = vpack.c.b16 %v582, %v578
    %v623 = vpack.c.b16 %v583, %v579
    %v624 = vpack.c.b16 %v584, %v580
    %v625 = vpack.c.b16 %v585, %v581
    %v626 = vpack.c.b16 %v590, %v586
    %v627 = vpack.c.b16 %v591, %v587
    %v628 = vpack.c.b16 %v592, %v588
    %v629 = vpack.c.b16 %v593, %v589
    %v630 = vpack.c.b16 %v598, %v594
    %v631 = vpack.c.b16 %v599, %v595
    %v632 = vpack.c.b16 %v600, %v596
    %v633 = vpack.c.b16 %v601, %v597
    %666 = vmatpush.bf16.msra.mxu0 %v630
    %667 = vmatpush.bf16.msra.mxu0 %v626
    %668 = vmatpush.bf16.msra.mxu0 %v622
    %669 = vmatpush.bf16.msra.mxu0 %v618
    %670 = vmatpush.bf16.msra.mxu0 %v614
    %671 = vmatpush.bf16.msra.mxu0 %v610
    %672 = vmatpush.bf16.msra.mxu0 %v606
    %673 = vmatpush.bf16.msra.mxu0 %v602
    %674 = vmatmul.bf16.gmra.mxu0 %v228
    %v675 = vpop.f32.mrf.mxu0
    %v676 = vadd.f32 %v464, %v675
    %v677 = vpop.f32.mrf.mxu0
    %678 = vdwg.mxu0
    %679 = vmatpush.bf16.msra.mxu0 %v631
    %680 = vmatpush.bf16.msra.mxu0 %v627
    %681 = vmatpush.bf16.msra.mxu0 %v623
    %682 = vmatpush.bf16.msra.mxu0 %v619
    %683 = vmatpush.bf16.msra.mxu0 %v615
    %684 = vmatpush.bf16.msra.mxu0 %v611
    %685 = vmatpush.bf16.msra.mxu0 %v607
    %686 = vmatpush.bf16.msra.mxu0 %v603
    %687 = vmatmul.bf16.gmra.mxu0 %v228
    %v688 = vpop.f32.mrf.mxu0
    %v689 = vadd.f32 %v477, %v688
    %v690 = vpop.f32.mrf.mxu0
    %691 = vdwg.mxu0
    %692 = vmatpush.bf16.msra.mxu0 %v632
    %693 = vmatpush.bf16.msra.mxu0 %v628
    %694 = vmatpush.bf16.msra.mxu0 %v624
    %695 = vmatpush.bf16.msra.mxu0 %v620
    %696 = vmatpush.bf16.msra.mxu0 %v616
    %697 = vmatpush.bf16.msra.mxu0 %v612
    %698 = vmatpush.bf16.msra.mxu0 %v608
    %699 = vmatpush.bf16.msra.mxu0 %v604
    %700 = vmatmul.bf16.gmra.mxu0 %v228
    %v701 = vpop.f32.mrf.mxu0
    %v702 = vadd.f32 %v490, %v701
    %v703 = vpop.f32.mrf.mxu0
    %704 = vdwg.mxu0
    %705 = vmatpush.bf16.msra.mxu0 %v633
    %706 = vmatpush.bf16.msra.mxu0 %v629
    %707 = vmatpush.bf16.msra.mxu0 %v625
    %708 = vmatpush.bf16.msra.mxu0 %v621
    %709 = vmatpush.bf16.msra.mxu0 %v617
    %710 = vmatpush.bf16.msra.mxu0 %v613
    %711 = vmatpush.bf16.msra.mxu0 %v609
    %712 = vmatpush.bf16.msra.mxu0 %v605
    %713 = vmatmul.bf16.gmra.mxu0 %v228
    %v714 = vpop.f32.mrf.mxu0
    %v715 = vadd.f32 %v503, %v714
    %v716 = vpop.f32.mrf.mxu0
    %717 = vdwg.mxu0
    %v718 = vld [vmem:[%s7] sm:$0xf]
    %v720 = vperm.slane %v718, 0
    %v721 = vperm.slane %v718, 1
    %v722 = vperm.slane %v718, 2
    %v723 = vperm.slane %v718, 3
    %v728 = vadd.f32 %v676, %v720
    %v729 = vadd.f32 %v689, %v721
    %v730 = vadd.f32 %v702, %v722
    %v731 = vadd.f32 %v715, %v723
    %v732 = vxor.u32 %v728, 2147483648
    %v733 = vxor.u32 %v729, 2147483648
    %v734 = vxor.u32 %v730, 2147483648
    %v735 = vmul.f32 %v732, 1.442695
    %v736 = vpow.pop %v735
    %v737 = vmul.f32 %v733, 1.442695
    %v738 = vpow.pop %v737
    %v739 = vmul.f32 %v734, 1.442695
    %v740 = vpow.pop %v739
    %v741 = vadd.f32 %v736, 1.0
    %v742 = vadd.f32 %v738, 1.0
    %v743 = vadd.f32 %v740, 1.0
    %v744 = vrcp.pop %v741
    %v745 = vmul.f32 %v741, %v744
    %v746 = vsub.f32 1.0, %v745
    %v747 = vmul.f32 %v744, %v746
    %v748 = vadd.f32 %v744, %v747
    %vm749 = vweird.f32 %v741
    %vm750 = vweird.f32 %v744
    %vm751 = vmor %vm749, %vm750
    %v752 = vsel %vm751, %v744, %v748
    %v753 = vand.u32 2147483647, %v741
    %vm754 = vcmp.eq.f32.partialorder %v753, 8.507059e+37
    %v755 = vand.u32 %v741, 2147483648
    %v756 = vor.u32 1.1754944e-38, %v755
    %v757 = vsel %vm754, %v756, %v752
    %v758 = vmul.f32 1.0, %v757
    %v759 = vrcp.pop %v742
    %v760 = vmul.f32 %v742, %v759
    %v761 = vsub.f32 1.0, %v760
    %v762 = vmul.f32 %v759, %v761
    %v763 = vadd.f32 %v759, %v762
    %vm764 = vweird.f32 %v742
    %vm765 = vweird.f32 %v759
    %vm766 = vmor %vm764, %vm765
    %v767 = vsel %vm766, %v759, %v763
    %v768 = vand.u32 2147483647, %v742
    %vm769 = vcmp.eq.f32.partialorder %v768, 8.507059e+37
    %v770 = vand.u32 %v742, 2147483648
    %v771 = vor.u32 1.1754944e-38, %v770
    %v772 = vsel %vm769, %v771, %v767
    %v773 = vmul.f32 1.0, %v772
    %v774 = vrcp.pop %v743
    %v775 = vmul.f32 %v743, %v774
    %v776 = vsub.f32 1.0, %v775
    %v777 = vmul.f32 %v774, %v776
    %v778 = vadd.f32 %v774, %v777
    %vm779 = vweird.f32 %v743
    %vm780 = vweird.f32 %v774
    %vm781 = vmor %vm779, %vm780
    %v782 = vsel %vm781, %v774, %v778
    %v783 = vand.u32 2147483647, %v743
    %vm784 = vcmp.eq.f32.partialorder %v783, 8.507059e+37
    %v785 = vand.u32 %v743, 2147483648
    %v786 = vor.u32 1.1754944e-38, %v785
    %v787 = vsel %vm784, %v786, %v782
    %v788 = vmul.f32 1.0, %v787
    %v789 = vtanh.pop %v731
    %v790 = vmul.f32 %v773, %v128
    %v791 = vmul.f32 %v758, %v789
    %v792 = vadd.f32 %v790, %v791
    %v793 = vtanh.pop %v792
    %v794 = vmul.f32 %v788, %v793
    %v795 = vpack.c.bf16 %v792, %v792
    %v797 = vperm.slane %v162, 0
    %v815 = vunpack.c.l.b16 %v146
    %v816 = vunpack.c.l.b16 %v147
    %v817 = vunpack.c.l.b16 %v148
    %v818 = vunpack.c.l.b16 %v149
    %v819 = vunpack.c.l.b16 %v150
    %v820 = vunpack.c.l.b16 %v151
    %v821 = vunpack.c.l.b16 %v152
    %v822 = vunpack.c.l.b16 %v153
    %v823 = vunpack.c.l.b16 %v154
    %v824 = vunpack.c.l.b16 %v155
    %v825 = vunpack.c.l.b16 %v156
    %v826 = vunpack.c.l.b16 %v157
    %v827 = vunpack.c.l.b16 %v158
    %v828 = vunpack.c.l.b16 %v159
    %v829 = vunpack.c.l.b16 %v160
    %v830 = vunpack.c.l.b16 %v161
    %v831 = vpack.c.b16 %v816, %v815
    %v832 = vpack.c.b16 %v818, %v817
    %v833 = vpack.c.b16 %v820, %v819
    %v834 = vpack.c.b16 %v822, %v821
    %v835 = vpack.c.b16 %v824, %v823
    %v836 = vpack.c.b16 %v826, %v825
    %v837 = vpack.c.b16 %v828, %v827
    %v838 = vpack.c.b16 %v830, %v829
    %847 = vmatpush.bf16.msra.mxu0 %v838
    %848 = vmatpush.bf16.msra.mxu0 %v837
    %849 = vmatpush.bf16.msra.mxu0 %v836
    %850 = vmatpush.bf16.msra.mxu0 %v835
    %851 = vmatpush.bf16.msra.mxu0 %v834
    %852 = vmatpush.bf16.msra.mxu0 %v833
    %853 = vmatpush.bf16.msra.mxu0 %v832
    %854 = vmatpush.bf16.msra.mxu0 %v831
    %855 = vmatmul.bf16.gmra.mxu0 %v795
    %v856 = vpop.f32.mrf.mxu0
    %v857 = vadd.f32 %v797, %v856
    %v858 = vpop.f32.mrf.mxu0
    %859 = vdwg.mxu0
    %v860 = vadd.f32 %v126, %v857
    %861 = vst [vmem:[#allocation13] sm:$0xff] %v860
    %v862 = vpack.c.bf16 %v860, %v860
    %863 = vmatpush.bf16.msra.mxu0 %v206
    %864 = vmatpush.bf16.msra.mxu0 %v205
    %865 = vmatpush.bf16.msra.mxu0 %v204
    %866 = vmatpush.bf16.msra.mxu0 %v203
    %867 = vmatpush.bf16.msra.mxu0 %v202
    %868 = vmatpush.bf16.msra.mxu0 %v201
    %869 = vmatpush.bf16.msra.mxu0 %v200
    %870 = vmatpush.bf16.msra.mxu0 %v199
    %871 = vmatmul.bf16.gmra.mxu0 %v862
    %v872 = vpop.f32.mrf.mxu0
    %v873 = vadd.f32 %v165, %v872
    %v874 = vpop.f32.mrf.mxu0
    %875 = vdwg.mxu0
    %v876 = vpack.c.bf16 %v873, %v873
    %s877 = scalar_lea.vmem [#allocation8], 256
    %v878 = vld [vmem:[%s877] sm:$0xff]
    %v879 = vld [vmem:[%s877 + $0x8] sm:$0xff]
    %v880 = vld [vmem:[%s877 + $0x10] sm:$0xff]
    %v881 = vld [vmem:[%s877 + $0x18] sm:$0xff]
    %v882 = vld [vmem:[%s877 + $0x20] sm:$0xff]
    %v883 = vld [vmem:[%s877 + $0x28] sm:$0xff]
    %v884 = vld [vmem:[%s877 + $0x30] sm:$0xff]
    %v885 = vld [vmem:[%s877 + $0x38] sm:$0xff]
    %v886 = vld [vmem:[%s877 + $0x40] sm:$0xff]
    %v887 = vld [vmem:[%s877 + $0x48] sm:$0xff]
    %v888 = vld [vmem:[%s877 + $0x50] sm:$0xff]
    %v889 = vld [vmem:[%s877 + $0x58] sm:$0xff]
    %v890 = vld [vmem:[%s877 + $0x60] sm:$0xff]
    %v891 = vld [vmem:[%s877 + $0x68] sm:$0xff]
    %v892 = vld [vmem:[%s877 + $0x70] sm:$0xff]
    %v893 = vld [vmem:[%s877 + $0x78] sm:$0xff]
    %v894 = vld [vmem:[%s877 + $0x80] sm:$0xff]
    %v895 = vld [vmem:[%s877 + $0x88] sm:$0xff]
    %v896 = vld [vmem:[%s877 + $0x90] sm:$0xff]
    %v897 = vld [vmem:[%s877 + $0x98] sm:$0xff]
    %v898 = vld [vmem:[%s877 + $0xa0] sm:$0xff]
    %v899 = vld [vmem:[%s877 + $0xa8] sm:$0xff]
    %v900 = vld [vmem:[%s877 + $0xb0] sm:$0xff]
    %v901 = vld [vmem:[%s877 + $0xb8] sm:$0xff]
    %v902 = vld [vmem:[%s877 + $0xc0] sm:$0xff]
    %v903 = vld [vmem:[%s877 + $0xc8] sm:$0xff]
    %v904 = vld [vmem:[%s877 + $0xd0] sm:$0xff]
    %v905 = vld [vmem:[%s877 + $0xd8] sm:$0xff]
    %v906 = vld [vmem:[%s877 + $0xe0] sm:$0xff]
    %v907 = vld [vmem:[%s877 + $0xe8] sm:$0xff]
    %v908 = vld [vmem:[%s877 + $0xf0] sm:$0xff]
    %v909 = vld [vmem:[%s877 + $0xf8] sm:$0xff]
    %v910 = vpack.c.bf16 %v794, %v794
    %s911 = scalar_lea.vmem [#allocation10], 256
    %v912 = vld [vmem:[%s911] sm:$0xff]
    %v913 = vld [vmem:[%s911 + $0x8] sm:$0xff]
    %v914 = vld [vmem:[%s911 + $0x10] sm:$0xff]
    %v915 = vld [vmem:[%s911 + $0x18] sm:$0xff]
    %v916 = vld [vmem:[%s911 + $0x20] sm:$0xff]
    %v917 = vld [vmem:[%s911 + $0x28] sm:$0xff]
    %v918 = vld [vmem:[%s911 + $0x30] sm:$0xff]
    %v919 = vld [vmem:[%s911 + $0x38] sm:$0xff]
    %v920 = vld [vmem:[%s911 + $0x40] sm:$0xff]
    %v921 = vld [vmem:[%s911 + $0x48] sm:$0xff]
    %v922 = vld [vmem:[%s911 + $0x50] sm:$0xff]
    %v923 = vld [vmem:[%s911 + $0x58] sm:$0xff]
    %v924 = vld [vmem:[%s911 + $0x60] sm:$0xff]
    %v925 = vld [vmem:[%s911 + $0x68] sm:$0xff]
    %v926 = vld [vmem:[%s911 + $0x70] sm:$0xff]
    %v927 = vld [vmem:[%s911 + $0x78] sm:$0xff]
    %v928 = vld [vmem:[%s911 + $0x80] sm:$0xff]
    %v929 = vld [vmem:[%s911 + $0x88] sm:$0xff]
    %v930 = vld [vmem:[%s911 + $0x90] sm:$0xff]
    %v931 = vld [vmem:[%s911 + $0x98] sm:$0xff]
    %v932 = vld [vmem:[%s911 + $0xa0] sm:$0xff]
    %v933 = vld [vmem:[%s911 + $0xa8] sm:$0xff]
    %v934 = vld [vmem:[%s911 + $0xb0] sm:$0xff]
    %v935 = vld [vmem:[%s911 + $0xb8] sm:$0xff]
    %v936 = vld [vmem:[%s911 + $0xc0] sm:$0xff]
    %v937 = vld [vmem:[%s911 + $0xc8] sm:$0xff]
    %v938 = vld [vmem:[%s911 + $0xd0] sm:$0xff]
    %v939 = vld [vmem:[%s911 + $0xd8] sm:$0xff]
    %v940 = vld [vmem:[%s911 + $0xe0] sm:$0xff]
    %v941 = vld [vmem:[%s911 + $0xe8] sm:$0xff]
    %v942 = vld [vmem:[%s911 + $0xf0] sm:$0xff]
    %v943 = vld [vmem:[%s911 + $0xf8] sm:$0xff]
    %v976 = vunpack.c.l.b16 %v912
    %v977 = vunpack.c.h.b16 %v912
    %v978 = vunpack.c.l.b16 %v913
    %v979 = vunpack.c.h.b16 %v913
    %v980 = vunpack.c.l.b16 %v914
    %v981 = vunpack.c.h.b16 %v914
    %v982 = vunpack.c.l.b16 %v915
    %v983 = vunpack.c.h.b16 %v915
    %v984 = vunpack.c.l.b16 %v916
    %v985 = vunpack.c.h.b16 %v916
    %v986 = vunpack.c.l.b16 %v917
    %v987 = vunpack.c.h.b16 %v917
    %v988 = vunpack.c.l.b16 %v918
    %v989 = vunpack.c.h.b16 %v918
    %v990 = vunpack.c.l.b16 %v919
    %v991 = vunpack.c.h.b16 %v919
    %v992 = vunpack.c.l.b16 %v920
    %v993 = vunpack.c.h.b16 %v920
    %v994 = vunpack.c.l.b16 %v921
    %v995 = vunpack.c.h.b16 %v921
    %v996 = vunpack.c.l.b16 %v922
    %v997 = vunpack.c.h.b16 %v922
    %v998 = vunpack.c.l.b16 %v923
    %v999 = vunpack.c.h.b16 %v923
    %v1000 = vunpack.c.l.b16 %v924
    %v1001 = vunpack.c.h.b16 %v924
    %v1002 = vunpack.c.l.b16 %v925
    %v1003 = vunpack.c.h.b16 %v925
    %v1004 = vunpack.c.l.b16 %v926
    %v1005 = vunpack.c.h.b16 %v926
    %v1006 = vunpack.c.l.b16 %v927
    %v1007 = vunpack.c.h.b16 %v927
    %v1008 = vunpack.c.l.b16 %v928
    %v1009 = vunpack.c.h.b16 %v928
    %v1010 = vunpack.c.l.b16 %v929
    %v1011 = vunpack.c.h.b16 %v929
    %v1012 = vunpack.c.l.b16 %v930
    %v1013 = vunpack.c.h.b16 %v930
    %v1014 = vunpack.c.l.b16 %v931
    %v1015 = vunpack.c.h.b16 %v931
    %v1016 = vunpack.c.l.b16 %v932
    %v1017 = vunpack.c.h.b16 %v932
    %v1018 = vunpack.c.l.b16 %v933
    %v1019 = vunpack.c.h.b16 %v933
    %v1020 = vunpack.c.l.b16 %v934
    %v1021 = vunpack.c.h.b16 %v934
    %v1022 = vunpack.c.l.b16 %v935
    %v1023 = vunpack.c.h.b16 %v935
    %v1024 = vunpack.c.l.b16 %v936
    %v1025 = vunpack.c.h.b16 %v936
    %v1026 = vunpack.c.l.b16 %v937
    %v1027 = vunpack.c.h.b16 %v937
    %v1028 = vunpack.c.l.b16 %v938
    %v1029 = vunpack.c.h.b16 %v938
    %v1030 = vunpack.c.l.b16 %v939
    %v1031 = vunpack.c.h.b16 %v939
    %v1032 = vunpack.c.l.b16 %v940
    %v1033 = vunpack.c.h.b16 %v940
    %v1034 = vunpack.c.l.b16 %v941
    %v1035 = vunpack.c.h.b16 %v941
    %v1036 = vunpack.c.l.b16 %v942
    %v1037 = vunpack.c.h.b16 %v942
    %v1038 = vunpack.c.l.b16 %v943
    %v1039 = vunpack.c.h.b16 %v943
    %v1040 = vpack.c.b16 %v980, %v976
    %v1041 = vpack.c.b16 %v981, %v977
    %v1042 = vpack.c.b16 %v982, %v978
    %v1043 = vpack.c.b16 %v983, %v979
    %v1044 = vpack.c.b16 %v988, %v984
    %v1045 = vpack.c.b16 %v989, %v985
    %v1046 = vpack.c.b16 %v990, %v986
    %v1047 = vpack.c.b16 %v991, %v987
    %v1048 = vpack.c.b16 %v996, %v992
    %v1049 = vpack.c.b16 %v997, %v993
    %v1050 = vpack.c.b16 %v998, %v994
    %v1051 = vpack.c.b16 %v999, %v995
    %v1052 = vpack.c.b16 %v1004, %v1000
    %v1053 = vpack.c.b16 %v1005, %v1001
    %v1054 = vpack.c.b16 %v1006, %v1002
    %v1055 = vpack.c.b16 %v1007, %v1003
    %v1056 = vpack.c.b16 %v1012, %v1008
    %v1057 = vpack.c.b16 %v1013, %v1009
    %v1058 = vpack.c.b16 %v1014, %v1010
    %v1059 = vpack.c.b16 %v1015, %v1011
    %v1060 = vpack.c.b16 %v1020, %v1016
    %v1061 = vpack.c.b16 %v1021, %v1017
    %v1062 = vpack.c.b16 %v1022, %v1018
    %v1063 = vpack.c.b16 %v1023, %v1019
    %v1064 = vpack.c.b16 %v1028, %v1024
    %v1065 = vpack.c.b16 %v1029, %v1025
    %v1066 = vpack.c.b16 %v1030, %v1026
    %v1067 = vpack.c.b16 %v1031, %v1027
    %v1068 = vpack.c.b16 %v1036, %v1032
    %v1069 = vpack.c.b16 %v1037, %v1033
    %v1070 = vpack.c.b16 %v1038, %v1034
    %v1071 = vpack.c.b16 %v1039, %v1035
    %1104 = vmatpush.bf16.msra.mxu0 %v1068
    %1105 = vmatpush.bf16.msra.mxu0 %v1064
    %1106 = vmatpush.bf16.msra.mxu0 %v1060
    %1107 = vmatpush.bf16.msra.mxu0 %v1056
    %1108 = vmatpush.bf16.msra.mxu0 %v1052
    %1109 = vmatpush.bf16.msra.mxu0 %v1048
    %1110 = vmatpush.bf16.msra.mxu0 %v1044
    %1111 = vmatpush.bf16.msra.mxu0 %v1040
    %1112 = vmatmul.bf16.gmra.mxu0 %v910
    %v1113 = vpop.f32.mrf.mxu0
    %v1114 = vadd.f32 0.0, %v1113
    %v1115 = vpop.f32.mrf.mxu0
    %1116 = vdwg.mxu0
    %1117 = vmatpush.bf16.msra.mxu0 %v1069
    %1118 = vmatpush.bf16.msra.mxu0 %v1065
    %1119 = vmatpush.bf16.msra.mxu0 %v1061
    %1120 = vmatpush.bf16.msra.mxu0 %v1057
    %1121 = vmatpush.bf16.msra.mxu0 %v1053
    %1122 = vmatpush.bf16.msra.mxu0 %v1049
    %1123 = vmatpush.bf16.msra.mxu0 %v1045
    %1124 = vmatpush.bf16.msra.mxu0 %v1041
    %1125 = vmatmul.bf16.gmra.mxu0 %v910
    %v1126 = vpop.f32.mrf.mxu0
    %v1127 = vadd.f32 0.0, %v1126
    %v1128 = vpop.f32.mrf.mxu0
    %1129 = vdwg.mxu0
    %1130 = vmatpush.bf16.msra.mxu0 %v1070
    %1131 = vmatpush.bf16.msra.mxu0 %v1066
    %1132 = vmatpush.bf16.msra.mxu0 %v1062
    %1133 = vmatpush.bf16.msra.mxu0 %v1058
    %1134 = vmatpush.bf16.msra.mxu0 %v1054
    %1135 = vmatpush.bf16.msra.mxu0 %v1050
    %1136 = vmatpush.bf16.msra.mxu0 %v1046
    %1137 = vmatpush.bf16.msra.mxu0 %v1042
    %1138 = vmatmul.bf16.gmra.mxu0 %v910
    %v1139 = vpop.f32.mrf.mxu0
    %v1140 = vadd.f32 0.0, %v1139
    %v1141 = vpop.f32.mrf.mxu0
    %1142 = vdwg.mxu0
    %1143 = vmatpush.bf16.msra.mxu0 %v1071
    %1144 = vmatpush.bf16.msra.mxu0 %v1067
    %1145 = vmatpush.bf16.msra.mxu0 %v1063
    %1146 = vmatpush.bf16.msra.mxu0 %v1059
    %1147 = vmatpush.bf16.msra.mxu0 %v1055
    %1148 = vmatpush.bf16.msra.mxu0 %v1051
    %1149 = vmatpush.bf16.msra.mxu0 %v1047
    %1150 = vmatpush.bf16.msra.mxu0 %v1043
    %1151 = vmatmul.bf16.gmra.mxu0 %v910
    %v1152 = vpop.f32.mrf.mxu0
    %v1153 = vadd.f32 0.0, %v1152
    %v1154 = vpop.f32.mrf.mxu0
    %1155 = vdwg.mxu0
    %v1188 = vunpack.c.l.b16 %v878
    %v1189 = vunpack.c.h.b16 %v878
    %v1190 = vunpack.c.l.b16 %v879
    %v1191 = vunpack.c.h.b16 %v879
    %v1192 = vunpack.c.l.b16 %v880
    %v1193 = vunpack.c.h.b16 %v880
    %v1194 = vunpack.c.l.b16 %v881
    %v1195 = vunpack.c.h.b16 %v881
    %v1196 = vunpack.c.l.b16 %v882
    %v1197 = vunpack.c.h.b16 %v882
    %v1198 = vunpack.c.l.b16 %v883
    %v1199 = vunpack.c.h.b16 %v883
    %v1200 = vunpack.c.l.b16 %v884
    %v1201 = vunpack.c.h.b16 %v884
    %v1202 = vunpack.c.l.b16 %v885
    %v1203 = vunpack.c.h.b16 %v885
    %v1204 = vunpack.c.l.b16 %v886
    %v1205 = vunpack.c.h.b16 %v886
    %v1206 = vunpack.c.l.b16 %v887
    %v1207 = vunpack.c.h.b16 %v887
    %v1208 = vunpack.c.l.b16 %v888
    %v1209 = vunpack.c.h.b16 %v888
    %v1210 = vunpack.c.l.b16 %v889
    %v1211 = vunpack.c.h.b16 %v889
    %v1212 = vunpack.c.l.b16 %v890
    %v1213 = vunpack.c.h.b16 %v890
    %v1214 = vunpack.c.l.b16 %v891
    %v1215 = vunpack.c.h.b16 %v891
    %v1216 = vunpack.c.l.b16 %v892
    %v1217 = vunpack.c.h.b16 %v892
    %v1218 = vunpack.c.l.b16 %v893
    %v1219 = vunpack.c.h.b16 %v893
    %v1220 = vunpack.c.l.b16 %v894
    %v1221 = vunpack.c.h.b16 %v894
    %v1222 = vunpack.c.l.b16 %v895
    %v1223 = vunpack.c.h.b16 %v895
    %v1224 = vunpack.c.l.b16 %v896
    %v1225 = vunpack.c.h.b16 %v896
    %v1226 = vunpack.c.l.b16 %v897
    %v1227 = vunpack.c.h.b16 %v897
    %v1228 = vunpack.c.l.b16 %v898
    %v1229 = vunpack.c.h.b16 %v898
    %v1230 = vunpack.c.l.b16 %v899
    %v1231 = vunpack.c.h.b16 %v899
    %v1232 = vunpack.c.l.b16 %v900
    %v1233 = vunpack.c.h.b16 %v900
    %v1234 = vunpack.c.l.b16 %v901
    %v1235 = vunpack.c.h.b16 %v901
    %v1236 = vunpack.c.l.b16 %v902
    %v1237 = vunpack.c.h.b16 %v902
    %v1238 = vunpack.c.l.b16 %v903
    %v1239 = vunpack.c.h.b16 %v903
    %v1240 = vunpack.c.l.b16 %v904
    %v1241 = vunpack.c.h.b16 %v904
    %v1242 = vunpack.c.l.b16 %v905
    %v1243 = vunpack.c.h.b16 %v905
    %v1244 = vunpack.c.l.b16 %v906
    %v1245 = vunpack.c.h.b16 %v906
    %v1246 = vunpack.c.l.b16 %v907
    %v1247 = vunpack.c.h.b16 %v907
    %v1248 = vunpack.c.l.b16 %v908
    %v1249 = vunpack.c.h.b16 %v908
    %v1250 = vunpack.c.l.b16 %v909
    %v1251 = vunpack.c.h.b16 %v909
    %v1252 = vpack.c.b16 %v1192, %v1188
    %v1253 = vpack.c.b16 %v1193, %v1189
    %v1254 = vpack.c.b16 %v1194, %v1190
    %v1255 = vpack.c.b16 %v1195, %v1191
    %v1256 = vpack.c.b16 %v1200, %v1196
    %v1257 = vpack.c.b16 %v1201, %v1197
    %v1258 = vpack.c.b16 %v1202, %v1198
    %v1259 = vpack.c.b16 %v1203, %v1199
    %v1260 = vpack.c.b16 %v1208, %v1204
    %v1261 = vpack.c.b16 %v1209, %v1205
    %v1262 = vpack.c.b16 %v1210, %v1206
    %v1263 = vpack.c.b16 %v1211, %v1207
    %v1264 = vpack.c.b16 %v1216, %v1212
    %v1265 = vpack.c.b16 %v1217, %v1213
    %v1266 = vpack.c.b16 %v1218, %v1214
    %v1267 = vpack.c.b16 %v1219, %v1215
    %v1268 = vpack.c.b16 %v1224, %v1220
    %v1269 = vpack.c.b16 %v1225, %v1221
    %v1270 = vpack.c.b16 %v1226, %v1222
    %v1271 = vpack.c.b16 %v1227, %v1223
    %v1272 = vpack.c.b16 %v1232, %v1228
    %v1273 = vpack.c.b16 %v1233, %v1229
    %v1274 = vpack.c.b16 %v1234, %v1230
    %v1275 = vpack.c.b16 %v1235, %v1231
    %v1276 = vpack.c.b16 %v1240, %v1236
    %v1277 = vpack.c.b16 %v1241, %v1237
    %v1278 = vpack.c.b16 %v1242, %v1238
    %v1279 = vpack.c.b16 %v1243, %v1239
    %v1280 = vpack.c.b16 %v1248, %v1244
    %v1281 = vpack.c.b16 %v1249, %v1245
    %v1282 = vpack.c.b16 %v1250, %v1246
    %v1283 = vpack.c.b16 %v1251, %v1247
    %1316 = vmatpush.bf16.msra.mxu0 %v1280
    %1317 = vmatpush.bf16.msra.mxu0 %v1276
    %1318 = vmatpush.bf16.msra.mxu0 %v1272
    %1319 = vmatpush.bf16.msra.mxu0 %v1268
    %1320 = vmatpush.bf16.msra.mxu0 %v1264
    %1321 = vmatpush.bf16.msra.mxu0 %v1260
    %1322 = vmatpush.bf16.msra.mxu0 %v1256
    %1323 = vmatpush.bf16.msra.mxu0 %v1252
    %1324 = vmatmul.bf16.gmra.mxu0 %v876
    %v1325 = vpop.f32.mrf.mxu0
    %v1326 = vadd.f32 %v1114, %v1325
    %v1327 = vpop.f32.mrf.mxu0
    %1328 = vdwg.mxu0
    %1329 = vmatpush.bf16.msra.mxu0 %v1281
    %1330 = vmatpush.bf16.msra.mxu0 %v1277
    %1331 = vmatpush.bf16.msra.mxu0 %v1273
    %1332 = vmatpush.bf16.msra.mxu0 %v1269
    %1333 = vmatpush.bf16.msra.mxu0 %v1265
    %1334 = vmatpush.bf16.msra.mxu0 %v1261
    %1335 = vmatpush.bf16.msra.mxu0 %v1257
    %1336 = vmatpush.bf16.msra.mxu0 %v1253
    %1337 = vmatmul.bf16.gmra.mxu0 %v876
    %v1338 = vpop.f32.mrf.mxu0
    %v1339 = vadd.f32 %v1127, %v1338
    %v1340 = vpop.f32.mrf.mxu0
    %1341 = vdwg.mxu0
    %1342 = vmatpush.bf16.msra.mxu0 %v1282
    %1343 = vmatpush.bf16.msra.mxu0 %v1278
    %1344 = vmatpush.bf16.msra.mxu0 %v1274
    %1345 = vmatpush.bf16.msra.mxu0 %v1270
    %1346 = vmatpush.bf16.msra.mxu0 %v1266
    %1347 = vmatpush.bf16.msra.mxu0 %v1262
    %1348 = vmatpush.bf16.msra.mxu0 %v1258
    %1349 = vmatpush.bf16.msra.mxu0 %v1254
    %1350 = vmatmul.bf16.gmra.mxu0 %v876
    %v1351 = vpop.f32.mrf.mxu0
    %v1352 = vadd.f32 %v1140, %v1351
    %v1353 = vpop.f32.mrf.mxu0
    %1354 = vdwg.mxu0
    %1355 = vmatpush.bf16.msra.mxu0 %v1283
    %1356 = vmatpush.bf16.msra.mxu0 %v1279
    %1357 = vmatpush.bf16.msra.mxu0 %v1275
    %1358 = vmatpush.bf16.msra.mxu0 %v1271
    %1359 = vmatpush.bf16.msra.mxu0 %v1267
    %1360 = vmatpush.bf16.msra.mxu0 %v1263
    %1361 = vmatpush.bf16.msra.mxu0 %v1259
    %1362 = vmatpush.bf16.msra.mxu0 %v1255
    %1363 = vmatmul.bf16.gmra.mxu0 %v876
    %v1364 = vpop.f32.mrf.mxu0
    %v1365 = vadd.f32 %v1153, %v1364
    %v1366 = vpop.f32.mrf.mxu0
    %1367 = vdwg.mxu0
    %s1368 = scalar_lea.vmem %s7, 4
    %v1369 = vld [vmem:[%s1368] sm:$0xf]
    %v1371 = vperm.slane %v1369, 0
    %v1372 = vperm.slane %v1369, 1
    %v1373 = vperm.slane %v1369, 2
    %v1374 = vperm.slane %v1369, 3
    %v1379 = vadd.f32 %v1326, %v1371
    %v1380 = vadd.f32 %v1339, %v1372
    %v1381 = vadd.f32 %v1352, %v1373
    %v1382 = vadd.f32 %v1365, %v1374
    %v1383 = vxor.u32 %v1379, 2147483648
    %v1384 = vxor.u32 %v1380, 2147483648
    %v1385 = vxor.u32 %v1381, 2147483648
    %v1386 = vmul.f32 %v1383, 1.442695
    %v1387 = vpow.pop %v1386
    %v1388 = vmul.f32 %v1384, 1.442695
    %v1389 = vpow.pop %v1388
    %v1390 = vmul.f32 %v1385, 1.442695
    %v1391 = vpow.pop %v1390
    %v1392 = vadd.f32 %v1387, 1.0
    %v1393 = vadd.f32 %v1389, 1.0
    %v1394 = vadd.f32 %v1391, 1.0
    %v1395 = vrcp.pop %v1392
    %v1396 = vmul.f32 %v1392, %v1395
    %v1397 = vsub.f32 1.0, %v1396
    %v1398 = vmul.f32 %v1395, %v1397
    %v1399 = vadd.f32 %v1395, %v1398
    %vm1400 = vweird.f32 %v1392
    %vm1401 = vweird.f32 %v1395
    %vm1402 = vmor %vm1400, %vm1401
    %v1403 = vsel %vm1402, %v1395, %v1399
    %v1404 = vand.u32 2147483647, %v1392
    %vm1405 = vcmp.eq.f32.partialorder %v1404, 8.507059e+37
    %v1406 = vand.u32 %v1392, 2147483648
    %v1407 = vor.u32 1.1754944e-38, %v1406
    %v1408 = vsel %vm1405, %v1407, %v1403
    %v1409 = vmul.f32 1.0, %v1408
    %v1410 = vrcp.pop %v1393
    %v1411 = vmul.f32 %v1393, %v1410
    %v1412 = vsub.f32 1.0, %v1411
    %v1413 = vmul.f32 %v1410, %v1412
    %v1414 = vadd.f32 %v1410, %v1413
    %vm1415 = vweird.f32 %v1393
    %vm1416 = vweird.f32 %v1410
    %vm1417 = vmor %vm1415, %vm1416
    %v1418 = vsel %vm1417, %v1410, %v1414
    %v1419 = vand.u32 2147483647, %v1393
    %vm1420 = vcmp.eq.f32.partialorder %v1419, 8.507059e+37
    %v1421 = vand.u32 %v1393, 2147483648
    %v1422 = vor.u32 1.1754944e-38, %v1421
    %v1423 = vsel %vm1420, %v1422, %v1418
    %v1424 = vmul.f32 1.0, %v1423
    %v1425 = vrcp.pop %v1394
    %v1426 = vmul.f32 %v1394, %v1425
    %v1427 = vsub.f32 1.0, %v1426
    %v1428 = vmul.f32 %v1425, %v1427
    %v1429 = vadd.f32 %v1425, %v1428
    %vm1430 = vweird.f32 %v1394
    %vm1431 = vweird.f32 %v1425
    %vm1432 = vmor %vm1430, %vm1431
    %v1433 = vsel %vm1432, %v1425, %v1429
    %v1434 = vand.u32 2147483647, %v1394
    %vm1435 = vcmp.eq.f32.partialorder %v1434, 8.507059e+37
    %v1436 = vand.u32 %v1394, 2147483648
    %v1437 = vor.u32 1.1754944e-38, %v1436
    %v1438 = vsel %vm1435, %v1437, %v1433
    %v1439 = vmul.f32 1.0, %v1438
    %v1440 = vtanh.pop %v1382
    %v1441 = vmul.f32 %v1424, %v792
    %v1442 = vmul.f32 %v1409, %v1440
    %v1443 = vadd.f32 %v1441, %v1442
    %v1444 = vtanh.pop %v1443
    %v1445 = vmul.f32 %v1439, %v1444
    %v1446 = vpack.c.bf16 %v1443, %v1443
    %1447 = vmatpush.bf16.msra.mxu0 %v838
    %1448 = vmatpush.bf16.msra.mxu0 %v837
    %1449 = vmatpush.bf16.msra.mxu0 %v836
    %1450 = vmatpush.bf16.msra.mxu0 %v835
    %1451 = vmatpush.bf16.msra.mxu0 %v834
    %1452 = vmatpush.bf16.msra.mxu0 %v833
    %1453 = vmatpush.bf16.msra.mxu0 %v832
    %1454 = vmatpush.bf16.msra.mxu0 %v831
    %1455 = vmatmul.bf16.gmra.mxu0 %v1446
    %v1456 = vpop.f32.mrf.mxu0
    %v1457 = vadd.f32 %v797, %v1456
    %v1458 = vpop.f32.mrf.mxu0
    %1459 = vdwg.mxu0
    %v1460 = vadd.f32 %v860, %v1457
    %s1461 = scalar_lea.vmem [#allocation13], 8
    %1462 = vst [vmem:[%s1461] sm:$0xff] %v1460
    %v1463 = vpack.c.bf16 %v1460, %v1460
    %1464 = vmatpush.bf16.msra.mxu0 %v206
    %1465 = vmatpush.bf16.msra.mxu0 %v205
    %1466 = vmatpush.bf16.msra.mxu0 %v204
    %1467 = vmatpush.bf16.msra.mxu0 %v203
    %1468 = vmatpush.bf16.msra.mxu0 %v202
    %1469 = vmatpush.bf16.msra.mxu0 %v201
    %1470 = vmatpush.bf16.msra.mxu0 %v200
    %1471 = vmatpush.bf16.msra.mxu0 %v199
    %1472 = vmatmul.bf16.gmra.mxu0 %v1463
    %v1473 = vpop.f32.mrf.mxu0
    %v1474 = vadd.f32 %v165, %v1473
    %v1475 = vpop.f32.mrf.mxu0
    %1476 = vdwg.mxu0
    %v1477 = vpack.c.bf16 %v1474, %v1474
    %s1478 = scalar_lea.vmem [#allocation8], 512
    %v1479 = vld [vmem:[%s1478] sm:$0xff]
    %v1480 = vld [vmem:[%s1478 + $0x8] sm:$0xff]
    %v1481 = vld [vmem:[%s1478 + $0x10] sm:$0xff]
    %v1482 = vld [vmem:[%s1478 + $0x18] sm:$0xff]
    %v1483 = vld [vmem:[%s1478 + $0x20] sm:$0xff]
    %v1484 = vld [vmem:[%s1478 + $0x28] sm:$0xff]
    %v1485 = vld [vmem:[%s1478 + $0x30] sm:$0xff]
    %v1486 = vld [vmem:[%s1478 + $0x38] sm:$0xff]
    %v1487 = vld [vmem:[%s1478 + $0x40] sm:$0xff]
    %v1488 = vld [vmem:[%s1478 + $0x48] sm:$0xff]
    %v1489 = vld [vmem:[%s1478 + $0x50] sm:$0xff]
    %v1490 = vld [vmem:[%s1478 + $0x58] sm:$0xff]
    %v1491 = vld [vmem:[%s1478 + $0x60] sm:$0xff]
    %v1492 = vld [vmem:[%s1478 + $0x68] sm:$0xff]
    %v1493 = vld [vmem:[%s1478 + $0x70] sm:$0xff]
    %v1494 = vld [vmem:[%s1478 + $0x78] sm:$0xff]
    %v1495 = vld [vmem:[%s1478 + $0x80] sm:$0xff]
    %v1496 = vld [vmem:[%s1478 + $0x88] sm:$0xff]
    %v1497 = vld [vmem:[%s1478 + $0x90] sm:$0xff]
    %v1498 = vld [vmem:[%s1478 + $0x98] sm:$0xff]
    %v1499 = vld [vmem:[%s1478 + $0xa0] sm:$0xff]
    %v1500 = vld [vmem:[%s1478 + $0xa8] sm:$0xff]
    %v1501 = vld [vmem:[%s1478 + $0xb0] sm:$0xff]
    %v1502 = vld [vmem:[%s1478 + $0xb8] sm:$0xff]
    %v1503 = vld [vmem:[%s1478 + $0xc0] sm:$0xff]
    %v1504 = vld [vmem:[%s1478 + $0xc8] sm:$0xff]
    %v1505 = vld [vmem:[%s1478 + $0xd0] sm:$0xff]
    %v1506 = vld [vmem:[%s1478 + $0xd8] sm:$0xff]
    %v1507 = vld [vmem:[%s1478 + $0xe0] sm:$0xff]
    %v1508 = vld [vmem:[%s1478 + $0xe8] sm:$0xff]
    %v1509 = vld [vmem:[%s1478 + $0xf0] sm:$0xff]
    %v1510 = vld [vmem:[%s1478 + $0xf8] sm:$0xff]
    %v1511 = vpack.c.bf16 %v1445, %v1445
    %s1512 = scalar_lea.vmem [#allocation10], 512
    %v1513 = vld [vmem:[%s1512] sm:$0xff]
    %v1514 = vld [vmem:[%s1512 + $0x8] sm:$0xff]
    %v1515 = vld [vmem:[%s1512 + $0x10] sm:$0xff]
    %v1516 = vld [vmem:[%s1512 + $0x18] sm:$0xff]
    %v1517 = vld [vmem:[%s1512 + $0x20] sm:$0xff]
    %v1518 = vld [vmem:[%s1512 + $0x28] sm:$0xff]
    %v1519 = vld [vmem:[%s1512 + $0x30] sm:$0xff]
    %v1520 = vld [vmem:[%s1512 + $0x38] sm:$0xff]
    %v1521 = vld [vmem:[%s1512 + $0x40] sm:$0xff]
    %v1522 = vld [vmem:[%s1512 + $0x48] sm:$0xff]
    %v1523 = vld [vmem:[%s1512 + $0x50] sm:$0xff]
    %v1524 = vld [vmem:[%s1512 + $0x58] sm:$0xff]
    %v1525 = vld [vmem:[%s1512 + $0x60] sm:$0xff]
    %v1526 = vld [vmem:[%s1512 + $0x68] sm:$0xff]
    %v1527 = vld [vmem:[%s1512 + $0x70] sm:$0xff]
    %v1528 = vld [vmem:[%s1512 + $0x78] sm:$0xff]
    %v1529 = vld [vmem:[%s1512 + $0x80] sm:$0xff]
    %v1530 = vld [vmem:[%s1512 + $0x88] sm:$0xff]
    %v1531 = vld [vmem:[%s1512 + $0x90] sm:$0xff]
    %v1532 = vld [vmem:[%s1512 + $0x98] sm:$0xff]
    %v1533 = vld [vmem:[%s1512 + $0xa0] sm:$0xff]
    %v1534 = vld [vmem:[%s1512 + $0xa8] sm:$0xff]
    %v1535 = vld [vmem:[%s1512 + $0xb0] sm:$0xff]
    %v1536 = vld [vmem:[%s1512 + $0xb8] sm:$0xff]
    %v1537 = vld [vmem:[%s1512 + $0xc0] sm:$0xff]
    %v1538 = vld [vmem:[%s1512 + $0xc8] sm:$0xff]
    %v1539 = vld [vmem:[%s1512 + $0xd0] sm:$0xff]
    %v1540 = vld [vmem:[%s1512 + $0xd8] sm:$0xff]
    %v1541 = vld [vmem:[%s1512 + $0xe0] sm:$0xff]
    %v1542 = vld [vmem:[%s1512 + $0xe8] sm:$0xff]
    %v1543 = vld [vmem:[%s1512 + $0xf0] sm:$0xff]
    %v1544 = vld [vmem:[%s1512 + $0xf8] sm:$0xff]
    %v1577 = vunpack.c.l.b16 %v1513
    %v1578 = vunpack.c.h.b16 %v1513
    %v1579 = vunpack.c.h.b16 %v1514
    %v1580 = vunpack.c.l.b16 %v1515
    %v1581 = vunpack.c.h.b16 %v1515
    %v1582 = vunpack.c.h.b16 %v1516
    %v1583 = vunpack.c.l.b16 %v1517
    %v1584 = vunpack.c.h.b16 %v1517
    %v1585 = vunpack.c.h.b16 %v1518
    %v1586 = vunpack.c.l.b16 %v1519
    %v1587 = vunpack.c.h.b16 %v1519
    %v1588 = vunpack.c.h.b16 %v1520
    %v1589 = vunpack.c.l.b16 %v1521
    %v1590 = vunpack.c.h.b16 %v1521
    %v1591 = vunpack.c.h.b16 %v1522
    %v1592 = vunpack.c.l.b16 %v1523
    %v1593 = vunpack.c.h.b16 %v1523
    %v1594 = vunpack.c.h.b16 %v1524
    %v1595 = vunpack.c.l.b16 %v1525
    %v1596 = vunpack.c.h.b16 %v1525
    %v1597 = vunpack.c.h.b16 %v1526
    %v1598 = vunpack.c.l.b16 %v1527
    %v1599 = vunpack.c.h.b16 %v1527
    %v1600 = vunpack.c.h.b16 %v1528
    %v1601 = vunpack.c.l.b16 %v1529
    %v1602 = vunpack.c.h.b16 %v1529
    %v1603 = vunpack.c.h.b16 %v1530
    %v1604 = vunpack.c.l.b16 %v1531
    %v1605 = vunpack.c.h.b16 %v1531
    %v1606 = vunpack.c.h.b16 %v1532
    %v1607 = vunpack.c.l.b16 %v1533
    %v1608 = vunpack.c.h.b16 %v1533
    %v1609 = vunpack.c.h.b16 %v1534
    %v1610 = vunpack.c.l.b16 %v1535
    %v1611 = vunpack.c.h.b16 %v1535
    %v1612 = vunpack.c.h.b16 %v1536
    %v1613 = vunpack.c.l.b16 %v1537
    %v1614 = vunpack.c.h.b16 %v1537
    %v1615 = vunpack.c.h.b16 %v1538
    %v1616 = vunpack.c.l.b16 %v1539
    %v1617 = vunpack.c.h.b16 %v1539
    %v1618 = vunpack.c.h.b16 %v1540
    %v1619 = vunpack.c.l.b16 %v1541
    %v1620 = vunpack.c.h.b16 %v1541
    %v1621 = vunpack.c.h.b16 %v1542
    %v1622 = vunpack.c.l.b16 %v1543
    %v1623 = vunpack.c.h.b16 %v1543
    %v1624 = vunpack.c.h.b16 %v1544
    %v1625 = vpack.c.b16 %v1580, %v1577
    %v1626 = vpack.c.b16 %v1581, %v1578
    %v1627 = vpack.c.b16 %v1582, %v1579
    %v1628 = vpack.c.b16 %v1586, %v1583
    %v1629 = vpack.c.b16 %v1587, %v1584
    %v1630 = vpack.c.b16 %v1588, %v1585
    %v1631 = vpack.c.b16 %v1592, %v1589
    %v1632 = vpack.c.b16 %v1593, %v1590
    %v1633 = vpack.c.b16 %v1594, %v1591
    %v1634 = vpack.c.b16 %v1598, %v1595
    %v1635 = vpack.c.b16 %v1599, %v1596
    %v1636 = vpack.c.b16 %v1600, %v1597
    %v1637 = vpack.c.b16 %v1604, %v1601
    %v1638 = vpack.c.b16 %v1605, %v1602
    %v1639 = vpack.c.b16 %v1606, %v1603
    %v1640 = vpack.c.b16 %v1610, %v1607
    %v1641 = vpack.c.b16 %v1611, %v1608
    %v1642 = vpack.c.b16 %v1612, %v1609
    %v1643 = vpack.c.b16 %v1616, %v1613
    %v1644 = vpack.c.b16 %v1617, %v1614
    %v1645 = vpack.c.b16 %v1618, %v1615
    %v1646 = vpack.c.b16 %v1622, %v1619
    %v1647 = vpack.c.b16 %v1623, %v1620
    %v1648 = vpack.c.b16 %v1624, %v1621
    %1673 = vmatpush.bf16.msra.mxu0 %v1646
    %1674 = vmatpush.bf16.msra.mxu0 %v1643
    %1675 = vmatpush.bf16.msra.mxu0 %v1640
    %1676 = vmatpush.bf16.msra.mxu0 %v1637
    %1677 = vmatpush.bf16.msra.mxu0 %v1634
    %1678 = vmatpush.bf16.msra.mxu0 %v1631
    %1679 = vmatpush.bf16.msra.mxu0 %v1628
    %1680 = vmatpush.bf16.msra.mxu0 %v1625
    %1681 = vmatmul.bf16.gmra.mxu0 %v1511
    %v1682 = vpop.f32.mrf.mxu0
    %v1683 = vadd.f32 0.0, %v1682
    %v1684 = vpop.f32.mrf.mxu0
    %1685 = vdwg.mxu0
    %1686 = vmatpush.bf16.msra.mxu0 %v1647
    %1687 = vmatpush.bf16.msra.mxu0 %v1644
    %1688 = vmatpush.bf16.msra.mxu0 %v1641
    %1689 = vmatpush.bf16.msra.mxu0 %v1638
    %1690 = vmatpush.bf16.msra.mxu0 %v1635
    %1691 = vmatpush.bf16.msra.mxu0 %v1632
    %1692 = vmatpush.bf16.msra.mxu0 %v1629
    %1693 = vmatpush.bf16.msra.mxu0 %v1626
    %1694 = vmatmul.bf16.gmra.mxu0 %v1511
    %v1695 = vpop.f32.mrf.mxu0
    %v1696 = vadd.f32 0.0, %v1695
    %v1697 = vpop.f32.mrf.mxu0
    %1698 = vdwg.mxu0
    %1699 = vmatpush.bf16.msra.mxu0 %v1648
    %1700 = vmatpush.bf16.msra.mxu0 %v1645
    %1701 = vmatpush.bf16.msra.mxu0 %v1642
    %1702 = vmatpush.bf16.msra.mxu0 %v1639
    %1703 = vmatpush.bf16.msra.mxu0 %v1636
    %1704 = vmatpush.bf16.msra.mxu0 %v1633
    %1705 = vmatpush.bf16.msra.mxu0 %v1630
    %1706 = vmatpush.bf16.msra.mxu0 %v1627
    %1707 = vmatmul.bf16.gmra.mxu0 %v1511
    %v1708 = vpop.f32.mrf.mxu0
    %v1709 = vadd.f32 0.0, %v1708
    %v1710 = vpop.f32.mrf.mxu0
    %1711 = vdwg.mxu0
    %v1744 = vunpack.c.l.b16 %v1479
    %v1745 = vunpack.c.h.b16 %v1479
    %v1746 = vunpack.c.h.b16 %v1480
    %v1747 = vunpack.c.l.b16 %v1481
    %v1748 = vunpack.c.h.b16 %v1481
    %v1749 = vunpack.c.h.b16 %v1482
    %v1750 = vunpack.c.l.b16 %v1483
    %v1751 = vunpack.c.h.b16 %v1483
    %v1752 = vunpack.c.h.b16 %v1484
    %v1753 = vunpack.c.l.b16 %v1485
    %v1754 = vunpack.c.h.b16 %v1485
    %v1755 = vunpack.c.h.b16 %v1486
    %v1756 = vunpack.c.l.b16 %v1487
    %v1757 = vunpack.c.h.b16 %v1487
    %v1758 = vunpack.c.h.b16 %v1488
    %v1759 = vunpack.c.l.b16 %v1489
    %v1760 = vunpack.c.h.b16 %v1489
    %v1761 = vunpack.c.h.b16 %v1490
    %v1762 = vunpack.c.l.b16 %v1491
    %v1763 = vunpack.c.h.b16 %v1491
    %v1764 = vunpack.c.h.b16 %v1492
    %v1765 = vunpack.c.l.b16 %v1493
    %v1766 = vunpack.c.h.b16 %v1493
    %v1767 = vunpack.c.h.b16 %v1494
    %v1768 = vunpack.c.l.b16 %v1495
    %v1769 = vunpack.c.h.b16 %v1495
    %v1770 = vunpack.c.h.b16 %v1496
    %v1771 = vunpack.c.l.b16 %v1497
    %v1772 = vunpack.c.h.b16 %v1497
    %v1773 = vunpack.c.h.b16 %v1498
    %v1774 = vunpack.c.l.b16 %v1499
    %v1775 = vunpack.c.h.b16 %v1499
    %v1776 = vunpack.c.h.b16 %v1500
    %v1777 = vunpack.c.l.b16 %v1501
    %v1778 = vunpack.c.h.b16 %v1501
    %v1779 = vunpack.c.h.b16 %v1502
    %v1780 = vunpack.c.l.b16 %v1503
    %v1781 = vunpack.c.h.b16 %v1503
    %v1782 = vunpack.c.h.b16 %v1504
    %v1783 = vunpack.c.l.b16 %v1505
    %v1784 = vunpack.c.h.b16 %v1505
    %v1785 = vunpack.c.h.b16 %v1506
    %v1786 = vunpack.c.l.b16 %v1507
    %v1787 = vunpack.c.h.b16 %v1507
    %v1788 = vunpack.c.h.b16 %v1508
    %v1789 = vunpack.c.l.b16 %v1509
    %v1790 = vunpack.c.h.b16 %v1509
    %v1791 = vunpack.c.h.b16 %v1510
    %v1792 = vpack.c.b16 %v1747, %v1744
    %v1793 = vpack.c.b16 %v1748, %v1745
    %v1794 = vpack.c.b16 %v1749, %v1746
    %v1795 = vpack.c.b16 %v1753, %v1750
    %v1796 = vpack.c.b16 %v1754, %v1751
    %v1797 = vpack.c.b16 %v1755, %v1752
    %v1798 = vpack.c.b16 %v1759, %v1756
    %v1799 = vpack.c.b16 %v1760, %v1757
    %v1800 = vpack.c.b16 %v1761, %v1758
    %v1801 = vpack.c.b16 %v1765, %v1762
    %v1802 = vpack.c.b16 %v1766, %v1763
    %v1803 = vpack.c.b16 %v1767, %v1764
    %v1804 = vpack.c.b16 %v1771, %v1768
    %v1805 = vpack.c.b16 %v1772, %v1769
    %v1806 = vpack.c.b16 %v1773, %v1770
    %v1807 = vpack.c.b16 %v1777, %v1774
    %v1808 = vpack.c.b16 %v1778, %v1775
    %v1809 = vpack.c.b16 %v1779, %v1776
    %v1810 = vpack.c.b16 %v1783, %v1780
    %v1811 = vpack.c.b16 %v1784, %v1781
    %v1812 = vpack.c.b16 %v1785, %v1782
    %v1813 = vpack.c.b16 %v1789, %v1786
    %v1814 = vpack.c.b16 %v1790, %v1787
    %v1815 = vpack.c.b16 %v1791, %v1788
    %1840 = vmatpush.bf16.msra.mxu0 %v1813
    %1841 = vmatpush.bf16.msra.mxu0 %v1810
    %1842 = vmatpush.bf16.msra.mxu0 %v1807
    %1843 = vmatpush.bf16.msra.mxu0 %v1804
    %1844 = vmatpush.bf16.msra.mxu0 %v1801
    %1845 = vmatpush.bf16.msra.mxu0 %v1798
    %1846 = vmatpush.bf16.msra.mxu0 %v1795
    %1847 = vmatpush.bf16.msra.mxu0 %v1792
    %1848 = vmatmul.bf16.gmra.mxu0 %v1477
    %v1849 = vpop.f32.mrf.mxu0
    %v1850 = vadd.f32 %v1683, %v1849
    %v1851 = vpop.f32.mrf.mxu0
    %1852 = vdwg.mxu0
    %1853 = vmatpush.bf16.msra.mxu0 %v1814
    %1854 = vmatpush.bf16.msra.mxu0 %v1811
    %1855 = vmatpush.bf16.msra.mxu0 %v1808
    %1856 = vmatpush.bf16.msra.mxu0 %v1805
    %1857 = vmatpush.bf16.msra.mxu0 %v1802
    %1858 = vmatpush.bf16.msra.mxu0 %v1799
    %1859 = vmatpush.bf16.msra.mxu0 %v1796
    %1860 = vmatpush.bf16.msra.mxu0 %v1793
    %1861 = vmatmul.bf16.gmra.mxu0 %v1477
    %v1862 = vpop.f32.mrf.mxu0
    %v1863 = vadd.f32 %v1696, %v1862
    %v1864 = vpop.f32.mrf.mxu0
    %1865 = vdwg.mxu0
    %1866 = vmatpush.bf16.msra.mxu0 %v1815
    %1867 = vmatpush.bf16.msra.mxu0 %v1812
    %1868 = vmatpush.bf16.msra.mxu0 %v1809
    %1869 = vmatpush.bf16.msra.mxu0 %v1806
    %1870 = vmatpush.bf16.msra.mxu0 %v1803
    %1871 = vmatpush.bf16.msra.mxu0 %v1800
    %1872 = vmatpush.bf16.msra.mxu0 %v1797
    %1873 = vmatpush.bf16.msra.mxu0 %v1794
    %1874 = vmatmul.bf16.gmra.mxu0 %v1477
    %v1875 = vpop.f32.mrf.mxu0
    %v1876 = vadd.f32 %v1709, %v1875
    %v1877 = vpop.f32.mrf.mxu0
    %1878 = vdwg.mxu0
    %s1879 = scalar_lea.vmem %s7, 8
    %v1880 = vld [vmem:[%s1879] sm:$0xf]
    %v1882 = vperm.slane %v1880, 0
    %v1883 = vperm.slane %v1880, 1
    %v1884 = vperm.slane %v1880, 3
    %v1888 = vadd.f32 %v1850, %v1882
    %v1889 = vadd.f32 %v1863, %v1883
    %v1890 = vadd.f32 %v1876, %v1884
    %v1891 = vxor.u32 %v1888, 2147483648
    %v1892 = vxor.u32 %v1889, 2147483648
    %v1893 = vmul.f32 %v1891, 1.442695
    %v1894 = vpow.pop %v1893
    %v1895 = vmul.f32 %v1892, 1.442695
    %v1896 = vpow.pop %v1895
    %v1897 = vadd.f32 %v1894, 1.0
    %v1898 = vadd.f32 %v1896, 1.0
    %v1899 = vrcp.pop %v1897
    %v1900 = vmul.f32 %v1897, %v1899
    %v1901 = vsub.f32 1.0, %v1900
    %v1902 = vmul.f32 %v1899, %v1901
    %v1903 = vadd.f32 %v1899, %v1902
    %vm1904 = vweird.f32 %v1897
    %vm1905 = vweird.f32 %v1899
    %vm1906 = vmor %vm1904, %vm1905
    %v1907 = vsel %vm1906, %v1899, %v1903
    %v1908 = vand.u32 2147483647, %v1897
    %vm1909 = vcmp.eq.f32.partialorder %v1908, 8.507059e+37
    %v1910 = vand.u32 %v1897, 2147483648
    %v1911 = vor.u32 1.1754944e-38, %v1910
    %v1912 = vsel %vm1909, %v1911, %v1907
    %v1913 = vmul.f32 1.0, %v1912
    %v1914 = vrcp.pop %v1898
    %v1915 = vmul.f32 %v1898, %v1914
    %v1916 = vsub.f32 1.0, %v1915
    %v1917 = vmul.f32 %v1914, %v1916
    %v1918 = vadd.f32 %v1914, %v1917
    %vm1919 = vweird.f32 %v1898
    %vm1920 = vweird.f32 %v1914
    %vm1921 = vmor %vm1919, %vm1920
    %v1922 = vsel %vm1921, %v1914, %v1918
    %v1923 = vand.u32 2147483647, %v1898
    %vm1924 = vcmp.eq.f32.partialorder %v1923, 8.507059e+37
    %v1925 = vand.u32 %v1898, 2147483648
    %v1926 = vor.u32 1.1754944e-38, %v1925
    %v1927 = vsel %vm1924, %v1926, %v1922
    %v1928 = vmul.f32 1.0, %v1927
    %v1929 = vtanh.pop %v1890
    %v1930 = vmul.f32 %v1928, %v1443
    %v1931 = vmul.f32 %v1913, %v1929
    %v1932 = vadd.f32 %v1930, %v1931
    %v1933 = vpack.c.bf16 %v1932, %v1932
    %1934 = vmatpush.bf16.msra.mxu0 %v838
    %1935 = vmatpush.bf16.msra.mxu0 %v837
    %1936 = vmatpush.bf16.msra.mxu0 %v836
    %1937 = vmatpush.bf16.msra.mxu0 %v835
    %1938 = vmatpush.bf16.msra.mxu0 %v834
    %1939 = vmatpush.bf16.msra.mxu0 %v833
    %1940 = vmatpush.bf16.msra.mxu0 %v832
    %1941 = vmatpush.bf16.msra.mxu0 %v831
    %1942 = vmatmul.bf16.gmra.mxu0 %v1933
    %v1943 = vpop.f32.mrf.mxu0
    %v1944 = vadd.f32 %v797, %v1943
    %v1945 = vpop.f32.mrf.mxu0
    %1946 = vdwg.mxu0
    %v1947 = vadd.f32 %v1460, %v1944
    %s1948 = scalar_lea.vmem [#allocation13], 16
    %1949 = vst [vmem:[%s1948] sm:$0xff] %v1947
    // Predicated region
    $region66: #{_run_fused.1} parent=1 // pred_check
      _
    $region67: #{_run_fused.1} parent=1 // pred_check_branch
      %1951 = sbr.rel (0) target = $region69
    $region68: #{_run_fused.1} parent=1 // pred_region
      %1953 = vsyncadd [#allocation4], 0
      %s1954 = sshll.u32 [#allocation13], 4
      %s1955 = int_to_ptr.vmem [resolvable:$true] %s1954
      %s1956 = sshll.u32 %s10, 4
      %s1957 = int_to_ptr.hbm [resolvable:$true] %s1956
      %1962 = dma.vmem_to_hbm [thread:$0]  %s1955, 384, %s1957, [#allocation4], 128, 128, 8
    $region69: #{_run_fused.1} parent=1 // pred_fallthru
      _
    // Predicated region
    $region70: #{_run_fused.1} parent=1 // pred_check
      _
    $region71: #{_run_fused.1} parent=1 // pred_check_branch
      %1964 = sbr.rel (0) target = $region73
    $region72: #{_run_fused.1} parent=1 // pred_region
      %1966 = dma.done [#allocation4], 384
    $region73: #{_run_fused.1} parent=1 // pred_fallthru
      _
    %1967 = vsyncpa [#allocation3], 1
    %1968 = vsyncpa [#allocation6], 1
    %1969 = vsyncpa [#allocation9], 1
    %1970 = vsyncpa [#allocation12], 1
    %1971 = vsyncpa [#allocation4], 1

</llo_original>
